<compile_context>
chip_gen: v7x
topology: tpu7x:2x2x1
jax: 0.10.0
libtpu: 0.0.40
codegen_flags: <defaults>
</compile_context>

<pallas_src>
import jax
import jax.numpy as jnp
from jax import lax
from jax.experimental import pallas as pl
from jax.experimental.pallas import tpu as pltpu


# ----------------------------- tiling helpers --------------------------------

def _col_tile(n, max_elems):
    """Largest 128-multiple tile t dividing n with t*n <= max_elems (VMEM budget)."""
    if n % 128 != 0:
        return n                      # smoke-test / odd sizes: single full block
    for t in (512, 256, 128):
        if n % t == 0 and t * n <= max_elems:
            return t
    return 128


# --------------------------- kernel 1: fused kNN ------------------------------

def _make_knn_kernel(k):
    def kernel(xt_ref, xc_ref, xx_ref, idx_ref):
        # xt_ref: (1, N, C)   all points (points on sublanes) -- MXU lhs, no transpose needed
        # xc_ref: (1, C, tn)  tile of query points (points on lanes)
        # xx_ref: (1, N, 1)   per-point squared norms (hoisted to the wrapper)
        # idx_ref:(1, k, 1, tn) int32: neighbor ids of the tn query points, one row per k-slot
        xt = xt_ref[0]                                                  # (N, C)
        xc = xc_ref[0]                                                  # (C, tn)
        g = jnp.dot(xt, xc, preferred_element_type=jnp.float32)         # (N, tn)  x_j . x_i
        xx_i = jnp.sum(xc * xc, axis=0, keepdims=True)                  # (1, tn)
        # negative squared distance; same formula as the PyTorch knn() (keeps tie behaviour)
        scores = 2.0 * g - xx_ref[0] - xx_i                             # (N, tn)
        n_pts, tn = scores.shape
        row_f = lax.broadcasted_iota(jnp.int32, (n_pts, tn), 0).astype(jnp.float32)
        neg_inf = jnp.float32(-jnp.inf)
        masked = scores
        for s in range(k):                                              # k static -> unrolled
            m = jnp.max(masked, axis=0, keepdims=True)                  # (1, tn) col-max
            sel = jnp.min(jnp.where(masked == m, row_f, jnp.float32(n_pts)),
                          axis=0, keepdims=True)                        # lowest-index argmax
            idx_ref[0, s] = sel.astype(jnp.int32)                       # lane-natural store
            masked = jnp.where(row_f == sel, neg_inf, masked)
    return kernel


def knn_indices(x_t, x, xx_col, k):
    """x_t: (B, N, C); x: (B, C, N); xx_col: (B, N, 1) -> (B, k, 1, N) int32 neighbor ids."""
    B, C, N = x.shape
    tn = _col_tile(N, max_elems=2 * 1024 * 1024)      # ~8 MiB f32 live for the (N, tn) scores
    cost = pl.CostEstimate(
        flops=2 * B * N * N * C + B * N * N * (2 * k + 4),
        transcendentals=0,
        bytes_accessed=B * (2 * C * N * 4 + N * 4 + k * N * 4),
    )
    return pl.pallas_call(
        _make_knn_kernel(k),
        out_shape=jax.ShapeDtypeStruct((B, k, 1, N), jnp.int32),
        grid=(B, N // tn),
        in_specs=[
            pl.BlockSpec((1, N, C), lambda b, i: (b, 0, 0)),    # all points (resident per batch)
            pl.BlockSpec((1, C, tn), lambda b, i: (b, 0, i)),   # tile of query points
            pl.BlockSpec((1, N, 1), lambda b, i: (b, 0, 0)),    # hoisted squared norms
        ],
        out_specs=pl.BlockSpec((1, k, 1, tn), lambda b, i: (b, 0, 0, i)),
        compiler_params=pltpu.CompilerParams(
            dimension_semantics=("parallel", "parallel")),
        cost_estimate=cost,
    )(x_t, x, xx_col)


# ------------------ kernel 2: fused gather + conv1-tail + conv2 + k-max -------

def _edge_conv_max_kernel(p_ref, qh_ref, ql_ref, idx_ref, w2_ref, b2_ref, out_ref):
    # p_ref:  (1, C, TN)    P tile = (W1a+W1b) x_i + b1                (f32)
    # qh/ql:  (1, C, N)     Q = W1b x split into bf16 hi/lo halves     (resident per batch)
    # idx_ref:(1, 1, 1, TN) int32 neighbor id of each point for this k-slot
    # w2_ref: (C, C) f32 ;  b2_ref: (C, 1) f32
    # out_ref:(1, C, TN)    running max across the k grid axis
    kk = pl.program_id(2)
    n_pts = qh_ref.shape[2]
    idx_row = idx_ref[0, 0]                                             # (1, TN)
    # One-hot gather matrix built directly in bf16 (0/1 exact) -> single-pass bf16 MXU.
    gmat = (lax.broadcasted_iota(jnp.int32, (n_pts, idx_row.shape[1]), 0)
            == idx_row).astype(jnp.bfloat16)                            # (N, TN)
    q_nb = (jnp.dot(qh_ref[0], gmat, preferred_element_type=jnp.float32)
            + jnp.dot(ql_ref[0], gmat, preferred_element_type=jnp.float32))   # (C, TN)

    h = jnp.maximum(p_ref[0] - q_nb, 0.0)                               # conv1 + BN + ReLU
    o = jnp.maximum(jnp.dot(w2_ref[...], h, preferred_element_type=jnp.float32)
                    + b2_ref[...], 0.0)                                 # conv2 + BN + ReLU

    @pl.when(kk == 0)
    def _():
        out_ref[0] = o

    @pl.when(kk > 0)
    def _():
        out_ref[0] = jnp.maximum(out_ref[0], o)


def fused_gather_conv_max(p, q_hi, q_lo, idx, w2, b2col):
    """p/(q_hi,q_lo): (B, C, N); idx: (B, k, 1, N) int32 -> (B, C, N) f32 (lane-dense)."""
    B, C, N = p.shape
    k = idx.shape[1]
    TN = _col_tile(N, max_elems=4 * 1024 * 1024)      # ~8 MiB bf16 for the (N, TN) one-hot
    cost = pl.CostEstimate(
        flops=B * k * (4 * C * N * N + 2 * C * C * N + 5 * C * N),
        transcendentals=0,
        bytes_accessed=B * (4 * C * N          # q_hi + q_lo (bf16), fetched once per batch
                            + 4 * C * N        # p tiles
                            + 4 * k * N        # neighbor ids
                            + 4 * C * N),      # output writeback
    )
    return pl.pallas_call(
        _edge_conv_max_kernel,
        out_shape=jax.ShapeDtypeStruct((B, C, N), jnp.float32),
        grid=(B, N // TN, k),
        in_specs=[
            pl.BlockSpec((1, C, TN), lambda b, j, kk: (b, 0, j)),          # P tile
            pl.BlockSpec((1, C, N), lambda b, j, kk: (b, 0, 0)),           # Q hi (resident)
            pl.BlockSpec((1, C, N), lambda b, j, kk: (b, 0, 0)),           # Q lo (resident)
            pl.BlockSpec((1, 1, 1, TN), lambda b, j, kk: (b, kk, 0, j)),   # neighbor ids
            pl.BlockSpec((C, C), lambda b, j, kk: (0, 0)),                 # W2_eff
            pl.BlockSpec((C, 1), lambda b, j, kk: (0, 0)),                 # b2_eff
        ],
        out_specs=pl.BlockSpec((1, C, TN), lambda b, j, kk: (b, 0, j)),
        compiler_params=pltpu.CompilerParams(
            dimension_semantics=("parallel", "parallel", "arbitrary")),
        cost_estimate=cost,
    )(p, q_hi, q_lo, idx, w2, b2col)


# --------------------------- parameter setup ---------------------------------

def init_params(key, in_channel):
    """Deterministic synthetic weights; BatchNorm (eval, default stats) is folded."""
    C = in_channel
    k1, k2, k3, k4 = jax.random.split(key, 4)
    w1 = 0.1 * jax.random.normal(k1, (C, 2 * C), dtype=jnp.float32)   # conv1 (out, in)
    b1 = 0.1 * jax.random.normal(k2, (C,), dtype=jnp.float32)
    w2 = 0.1 * jax.random.normal(k3, (C, C), dtype=jnp.float32)       # conv2 (out, in)
    b2 = 0.1 * jax.random.normal(k4, (C,), dtype=jnp.float32)

    # BatchNorm2d defaults (eval): gamma=1, beta=0, running_mean=0, running_var=1
    eps = 1e-5
    s = 1.0 / jnp.sqrt(1.0 + eps)
    w1_eff, b1_eff = w1 * s, b1 * s
    w2_eff, b2_eff = w2 * s, b2 * s

    w1a, w1b = w1_eff[:, :C], w1_eff[:, C:]
    # Stacked projection weight: rows [0:C] -> (W1a+W1b) (applied to x_i), rows [C:2C] -> W1b.
    w_stack = jnp.concatenate([w1a + w1b, w1b], axis=0).astype(jnp.float32)     # (2C, C)
    b_stack = jnp.concatenate([b1_eff, jnp.zeros_like(b1_eff)]).reshape(2 * C, 1)

    kernel_params = dict(
        w_stack=w_stack,
        b_stack=b_stack.astype(jnp.float32),
        w2=w2_eff.astype(jnp.float32),
        b2col=b2_eff.reshape(C, 1).astype(jnp.float32),
    )
    ref_params = dict(
        w1t=w1_eff.T.astype(jnp.float32),
        b1=b1_eff.reshape(1, C).astype(jnp.float32),
        w2t=w2_eff.T.astype(jnp.float32),
        b2=b2_eff.reshape(1, C).astype(jnp.float32),
    )
    return kernel_params, ref_params


# --------------------------- forward pass -------------------------------------

def elgraph_block_forward(features, params, knn_num):
    """features: (B, C, N, 1) -> (B, C, N, 1), matching the PyTorch module."""
    B, C, N, _ = features.shape
    x = features.reshape(B, C, N).astype(jnp.float32)
    x_t = jnp.transpose(x, (0, 2, 1))                          # (B, N, C) MXU-friendly lhs
    xx_col = jnp.sum(x_t * x_t, axis=2, keepdims=True)         # (B, N, 1) hoisted norms

    idx = knn_indices(x_t, x, xx_col, knn_num)                 # Pallas kernel 1: (B, k, 1, N)

    # Per-batch conv1 projections with a single stacked matmul (exploits conv1 linearity).
    pq = jnp.einsum("oc,bcn->bon", params["w_stack"], x,
                    precision=jax.lax.Precision.HIGHEST) + params["b_stack"][None]  # (B, 2C, N)
    p = pq[:, :C, :]                                           # (W1a+W1b) x + b1
    q = pq[:, C:, :]                                           # W1b x
    q_hi = q.astype(jnp.bfloat16)                              # hi/lo bf16 split so the gather
    q_lo = (q - q_hi.astype(jnp.float32)).astype(jnp.bfloat16)  # matmul runs on the bf16 MXU

    out = fused_gather_conv_max(p, q_hi, q_lo, idx, params["w2"], params["b2col"])
    return out[..., None]                                      # (B, C, N, 1) -- no transpose


def reference_forward(features, ref_params, knn_num):
    """Pure-JAX reference mirroring the PyTorch math with the same BN-folded params."""
    B, C, N, _ = features.shape
    x = features.reshape(B, C, N).astype(jnp.float32)
    g = jnp.einsum("bcn,bcm->bnm", x, x)
    xx = jnp.sum(x * x, axis=1)
    neg_dist = 2.0 * g - xx[:, :, None] - xx[:, None, :]
    idx = jax.lax.top_k(neg_dist, knn_num)[1]                          # (B, N, k)
    x_t = jnp.transpose(x, (0, 2, 1))                                  # (B, N, C)
    neigh = jax.vmap(lambda xt, id_: xt[id_])(x_t, idx)                # (B, N, k, C)
    center = jnp.broadcast_to(x_t[:, :, None, :], neigh.shape)
    feat = jnp.concatenate([center, center - neigh], axis=-1)          # (B, N, k, 2C)
    h = jnp.maximum(jnp.einsum("bnkc,cd->bnkd", feat, ref_params["w1t"],
                               precision=jax.lax.Precision.HIGHEST) + ref_params["b1"], 0.0)
    o = jnp.maximum(jnp.einsum("bnkc,cd->bnkd", h, ref_params["w2t"],
                               precision=jax.lax.Precision.HIGHEST) + ref_params["b2"], 0.0)
    o = o.max(axis=2)                                                  # (B, N, C)
    return jnp.transpose(o, (0, 2, 1))[..., None]


# --------------------------- main ---------------------------------------------

if __name__ == "__main__":
    B, C, N = 2, 8, 128
    knn_num = 6

    key = jax.random.PRNGKey(0)
    k_feat, k_param = jax.random.split(key)
    features = jax.random.normal(k_feat, (B, C, N, 1), dtype=jnp.float32)
    kernel_params, ref_params = init_params(k_param, C)

    fwd = jax.jit(elgraph_block_forward, static_argnums=2)
    out = jax.block_until_ready(fwd(features, kernel_params, knn_num))

    ref = jax.block_until_ready(reference_forward(features, ref_params, knn_num))
    assert out.shape == (B, C, N, 1), out.shape
    max_err = float(jnp.max(jnp.abs(out - ref)))
    assert jnp.allclose(out, ref, atol=2e-4, rtol=2e-4), max_err

    print("KERNEL_OK")
</pallas_src>

<mosaic_0001>
module attributes {stable_mosaic.version = 11 : i64} {
  func.func @kernel(%arg0: i32, %arg1: i32, %arg2: memref<1x128x8xf32, #tpu.memory_space<vmem>>, %arg3: memref<1x8x128xf32, #tpu.memory_space<vmem>>, %arg4: memref<1x128x1xf32, #tpu.memory_space<vmem>>, %arg5: memref<1x6x1x128xi32, #tpu.memory_space<vmem>>) attributes {dimension_semantics = [#tpu.dimension_semantics<parallel>, #tpu.dimension_semantics<parallel>], iteration_bounds = array<i64: 2, 1>, scalar_prefetch = 0 : i64, scratch_operands = 0 : i64, tpu.core_type = #tpu.core_type<tc>, window_params = [{transform_indices = @transform_0, window_bounds = array<i64: 1, 128, 8>}, {transform_indices = @transform_1, window_bounds = array<i64: 1, 8, 128>}, {transform_indices = @transform_2, window_bounds = array<i64: 1, 128, 1>}, {transform_indices = @transform_3, window_bounds = array<i64: 1, 6, 1, 128>}]} {
    %c0 = arith.constant 0 : index
    %c0_0 = arith.constant 0 : index
    %c0_1 = arith.constant 0 : index
    %0 = vector.load %arg2[%c0, %c0_0, %c0_1] : memref<1x128x8xf32, #tpu.memory_space<vmem>>, vector<1x128x8xf32>
    %1 = vector.shape_cast %0 : vector<1x128x8xf32> to vector<128x8xf32>
    %c0_2 = arith.constant 0 : index
    %c0_3 = arith.constant 0 : index
    %c0_4 = arith.constant 0 : index
    %2 = vector.load %arg3[%c0_2, %c0_3, %c0_4] : memref<1x8x128xf32, #tpu.memory_space<vmem>>, vector<1x8x128xf32>
    %3 = vector.shape_cast %2 : vector<1x8x128xf32> to vector<8x128xf32>
    %cst = arith.constant dense<0.000000e+00> : vector<128x128xf32>
    %4 = tpu.matmul %1, %3, %cst {dimension_numbers = #tpu.dot_dimension_numbers<[1], [0], [0], [1], [0, 0, 1, 1], [], []>} : vector<128x8xf32>, vector<8x128xf32>, vector<128x128xf32> -> vector<128x128xf32>
    %5 = arith.mulf %3, %3 : vector<8x128xf32>
    %cst_5 = arith.constant dense<0.000000e+00> : vector<128xf32>
    %6 = vector.multi_reduction <add>, %5, %cst_5 [0] : vector<8x128xf32> to vector<128xf32>
    %7 = vector.shape_cast %6 : vector<128xf32> to vector<1x128xf32>
    %cst_6 = arith.constant 2.000000e+00 : f32
    %8 = vector.broadcast %cst_6 : f32 to vector<128x128xf32>
    %9 = arith.mulf %8, %4 : vector<128x128xf32>
    %c0_7 = arith.constant 0 : index
    %c0_8 = arith.constant 0 : index
    %c0_9 = arith.constant 0 : index
    %10 = vector.load %arg4[%c0_7, %c0_8, %c0_9] : memref<1x128x1xf32, #tpu.memory_space<vmem>>, vector<1x128x1xf32>
    %11 = vector.shape_cast %10 : vector<1x128x1xf32> to vector<128x1xf32>
    %12 = vector.broadcast %11 : vector<128x1xf32> to vector<128x128xf32>
    %13 = arith.subf %9, %12 : vector<128x128xf32>
    %14 = vector.broadcast %7 : vector<1x128xf32> to vector<128x128xf32>
    %15 = arith.subf %13, %14 : vector<128x128xf32>
    %16 = tpu.iota {dimensions = array<i32: 0>} : vector<128x128xi32>
    %17 = arith.sitofp %16 : vector<128x128xi32> to vector<128x128xf32>
    %cst_10 = arith.constant dense<0xFF800000> : vector<128xf32>
    %18 = vector.multi_reduction <maximumf>, %15, %cst_10 [0] : vector<128x128xf32> to vector<128xf32>
    %19 = vector.shape_cast %18 : vector<128xf32> to vector<1x128xf32>
    %20 = vector.broadcast %19 : vector<1x128xf32> to vector<128x128xf32>
    %21 = arith.cmpf oeq, %15, %20 : vector<128x128xf32>
    %cst_11 = arith.constant 1.280000e+02 : f32
    %22 = vector.broadcast %cst_11 : f32 to vector<128x128xf32>
    %23 = arith.select %21, %17, %22 : vector<128x128xi1>, vector<128x128xf32>
    %cst_12 = arith.constant dense<0x7F800000> : vector<128xf32>
    %24 = vector.multi_reduction <minimumf>, %23, %cst_12 [0] : vector<128x128xf32> to vector<128xf32>
    %25 = vector.shape_cast %24 : vector<128xf32> to vector<1x128xf32>
    %26 = arith.fptosi %25 : vector<1x128xf32> to vector<1x128xi32>
    %c0_13 = arith.constant 0 : index
    %c0_14 = arith.constant 0 : index
    %c0_15 = arith.constant 0 : index
    %c0_16 = arith.constant 0 : index
    %27 = vector.load %arg5[%c0_13, %c0_14, %c0_15, %c0_16] : memref<1x6x1x128xi32, #tpu.memory_space<vmem>>, vector<1x1x1x128xi32>
    %28 = vector.shape_cast %27 : vector<1x1x1x128xi32> to vector<1x128xi32>
    %29 = vector.shape_cast %26 : vector<1x128xi32> to vector<1x1x1x128xi32>
    tpu.vector_store %arg5[%c0_13, %c0_14, %c0_15, %c0_16], %29 {strides = array<i32>} : memref<1x6x1x128xi32, #tpu.memory_space<vmem>>, vector<1x1x1x128xi32>,
    %30 = vector.broadcast %25 : vector<1x128xf32> to vector<128x128xf32>
    %31 = arith.cmpf oeq, %17, %30 : vector<128x128xf32>
    %cst_17 = arith.constant 0xFF800000 : f32
    %32 = vector.broadcast %cst_17 : f32 to vector<128x128xf32>
    %33 = arith.select %31, %32, %15 : vector<128x128xi1>, vector<128x128xf32>
    %cst_18 = arith.constant dense<0xFF800000> : vector<128xf32>
    %34 = vector.multi_reduction <maximumf>, %33, %cst_18 [0] : vector<128x128xf32> to vector<128xf32>
    %35 = vector.shape_cast %34 : vector<128xf32> to vector<1x128xf32>
    %36 = vector.broadcast %35 : vector<1x128xf32> to vector<128x128xf32>
    %37 = arith.cmpf oeq, %33, %36 : vector<128x128xf32>
    %cst_19 = arith.constant 1.280000e+02 : f32
    %38 = vector.broadcast %cst_19 : f32 to vector<128x128xf32>
    %39 = arith.select %37, %17, %38 : vector<128x128xi1>, vector<128x128xf32>
    %cst_20 = arith.constant dense<0x7F800000> : vector<128xf32>
    %40 = vector.multi_reduction <minimumf>, %39, %cst_20 [0] : vector<128x128xf32> to vector<128xf32>
    %41 = vector.shape_cast %40 : vector<128xf32> to vector<1x128xf32>
    %42 = arith.fptosi %41 : vector<1x128xf32> to vector<1x128xi32>
    %c0_21 = arith.constant 0 : index
    %c1 = arith.constant 1 : index
    %c0_22 = arith.constant 0 : index
    %c0_23 = arith.constant 0 : index
    %43 = vector.load %arg5[%c0_21, %c1, %c0_22, %c0_23] : memref<1x6x1x128xi32, #tpu.memory_space<vmem>>, vector<1x1x1x128xi32>
    %44 = vector.shape_cast %43 : vector<1x1x1x128xi32> to vector<1x128xi32>
    %45 = vector.shape_cast %42 : vector<1x128xi32> to vector<1x1x1x128xi32>
    tpu.vector_store %arg5[%c0_21, %c1, %c0_22, %c0_23], %45 {strides = array<i32>} : memref<1x6x1x128xi32, #tpu.memory_space<vmem>>, vector<1x1x1x128xi32>,
    %46 = vector.broadcast %41 : vector<1x128xf32> to vector<128x128xf32>
    %47 = arith.cmpf oeq, %17, %46 : vector<128x128xf32>
    %cst_24 = arith.constant 0xFF800000 : f32
    %48 = vector.broadcast %cst_24 : f32 to vector<128x128xf32>
    %49 = arith.select %47, %48, %33 : vector<128x128xi1>, vector<128x128xf32>
    %cst_25 = arith.constant dense<0xFF800000> : vector<128xf32>
    %50 = vector.multi_reduction <maximumf>, %49, %cst_25 [0] : vector<128x128xf32> to vector<128xf32>
    %51 = vector.shape_cast %50 : vector<128xf32> to vector<1x128xf32>
    %52 = vector.broadcast %51 : vector<1x128xf32> to vector<128x128xf32>
    %53 = arith.cmpf oeq, %49, %52 : vector<128x128xf32>
    %cst_26 = arith.constant 1.280000e+02 : f32
    %54 = vector.broadcast %cst_26 : f32 to vector<128x128xf32>
    %55 = arith.select %53, %17, %54 : vector<128x128xi1>, vector<128x128xf32>
    %cst_27 = arith.constant dense<0x7F800000> : vector<128xf32>
    %56 = vector.multi_reduction <minimumf>, %55, %cst_27 [0] : vector<128x128xf32> to vector<128xf32>
    %57 = vector.shape_cast %56 : vector<128xf32> to vector<1x128xf32>
    %58 = arith.fptosi %57 : vector<1x128xf32> to vector<1x128xi32>
    %c0_28 = arith.constant 0 : index
    %c2 = arith.constant 2 : index
    %c0_29 = arith.constant 0 : index
    %c0_30 = arith.constant 0 : index
    %59 = vector.load %arg5[%c0_28, %c2, %c0_29, %c0_30] : memref<1x6x1x128xi32, #tpu.memory_space<vmem>>, vector<1x1x1x128xi32>
    %60 = vector.shape_cast %59 : vector<1x1x1x128xi32> to vector<1x128xi32>
    %61 = vector.shape_cast %58 : vector<1x128xi32> to vector<1x1x1x128xi32>
    tpu.vector_store %arg5[%c0_28, %c2, %c0_29, %c0_30], %61 {strides = array<i32>} : memref<1x6x1x128xi32, #tpu.memory_space<vmem>>, vector<1x1x1x128xi32>,
    %62 = vector.broadcast %57 : vector<1x128xf32> to vector<128x128xf32>
    %63 = arith.cmpf oeq, %17, %62 : vector<128x128xf32>
    %cst_31 = arith.constant 0xFF800000 : f32
    %64 = vector.broadcast %cst_31 : f32 to vector<128x128xf32>
    %65 = arith.select %63, %64, %49 : vector<128x128xi1>, vector<128x128xf32>
    %cst_32 = arith.constant dense<0xFF800000> : vector<128xf32>
    %66 = vector.multi_reduction <maximumf>, %65, %cst_32 [0] : vector<128x128xf32> to vector<128xf32>
    %67 = vector.shape_cast %66 : vector<128xf32> to vector<1x128xf32>
    %68 = vector.broadcast %67 : vector<1x128xf32> to vector<128x128xf32>
    %69 = arith.cmpf oeq, %65, %68 : vector<128x128xf32>
    %cst_33 = arith.constant 1.280000e+02 : f32
    %70 = vector.broadcast %cst_33 : f32 to vector<128x128xf32>
    %71 = arith.select %69, %17, %70 : vector<128x128xi1>, vector<128x128xf32>
    %cst_34 = arith.constant dense<0x7F800000> : vector<128xf32>
    %72 = vector.multi_reduction <minimumf>, %71, %cst_34 [0] : vector<128x128xf32> to vector<128xf32>
    %73 = vector.shape_cast %72 : vector<128xf32> to vector<1x128xf32>
    %74 = arith.fptosi %73 : vector<1x128xf32> to vector<1x128xi32>
    %c0_35 = arith.constant 0 : index
    %c3 = arith.constant 3 : index
    %c0_36 = arith.constant 0 : index
    %c0_37 = arith.constant 0 : index
    %75 = vector.load %arg5[%c0_35, %c3, %c0_36, %c0_37] : memref<1x6x1x128xi32, #tpu.memory_space<vmem>>, vector<1x1x1x128xi32>
    %76 = vector.shape_cast %75 : vector<1x1x1x128xi32> to vector<1x128xi32>
    %77 = vector.shape_cast %74 : vector<1x128xi32> to vector<1x1x1x128xi32>
    tpu.vector_store %arg5[%c0_35, %c3, %c0_36, %c0_37], %77 {strides = array<i32>} : memref<1x6x1x128xi32, #tpu.memory_space<vmem>>, vector<1x1x1x128xi32>,
    %78 = vector.broadcast %73 : vector<1x128xf32> to vector<128x128xf32>
    %79 = arith.cmpf oeq, %17, %78 : vector<128x128xf32>
    %cst_38 = arith.constant 0xFF800000 : f32
    %80 = vector.broadcast %cst_38 : f32 to vector<128x128xf32>
    %81 = arith.select %79, %80, %65 : vector<128x128xi1>, vector<128x128xf32>
    %cst_39 = arith.constant dense<0xFF800000> : vector<128xf32>
    %82 = vector.multi_reduction <maximumf>, %81, %cst_39 [0] : vector<128x128xf32> to vector<128xf32>
    %83 = vector.shape_cast %82 : vector<128xf32> to vector<1x128xf32>
    %84 = vector.broadcast %83 : vector<1x128xf32> to vector<128x128xf32>
    %85 = arith.cmpf oeq, %81, %84 : vector<128x128xf32>
    %cst_40 = arith.constant 1.280000e+02 : f32
    %86 = vector.broadcast %cst_40 : f32 to vector<128x128xf32>
    %87 = arith.select %85, %17, %86 : vector<128x128xi1>, vector<128x128xf32>
    %cst_41 = arith.constant dense<0x7F800000> : vector<128xf32>
    %88 = vector.multi_reduction <minimumf>, %87, %cst_41 [0] : vector<128x128xf32> to vector<128xf32>
    %89 = vector.shape_cast %88 : vector<128xf32> to vector<1x128xf32>
    %90 = arith.fptosi %89 : vector<1x128xf32> to vector<1x128xi32>
    %c0_42 = arith.constant 0 : index
    %c4 = arith.constant 4 : index
    %c0_43 = arith.constant 0 : index
    %c0_44 = arith.constant 0 : index
    %91 = vector.load %arg5[%c0_42, %c4, %c0_43, %c0_44] : memref<1x6x1x128xi32, #tpu.memory_space<vmem>>, vector<1x1x1x128xi32>
    %92 = vector.shape_cast %91 : vector<1x1x1x128xi32> to vector<1x128xi32>
    %93 = vector.shape_cast %90 : vector<1x128xi32> to vector<1x1x1x128xi32>
    tpu.vector_store %arg5[%c0_42, %c4, %c0_43, %c0_44], %93 {strides = array<i32>} : memref<1x6x1x128xi32, #tpu.memory_space<vmem>>, vector<1x1x1x128xi32>,
    %94 = vector.broadcast %89 : vector<1x128xf32> to vector<128x128xf32>
    %95 = arith.cmpf oeq, %17, %94 : vector<128x128xf32>
    %cst_45 = arith.constant 0xFF800000 : f32
    %96 = vector.broadcast %cst_45 : f32 to vector<128x128xf32>
    %97 = arith.select %95, %96, %81 : vector<128x128xi1>, vector<128x128xf32>
    %cst_46 = arith.constant dense<0xFF800000> : vector<128xf32>
    %98 = vector.multi_reduction <maximumf>, %97, %cst_46 [0] : vector<128x128xf32> to vector<128xf32>
    %99 = vector.shape_cast %98 : vector<128xf32> to vector<1x128xf32>
    %100 = vector.broadcast %99 : vector<1x128xf32> to vector<128x128xf32>
    %101 = arith.cmpf oeq, %97, %100 : vector<128x128xf32>
    %cst_47 = arith.constant 1.280000e+02 : f32
    %102 = vector.broadcast %cst_47 : f32 to vector<128x128xf32>
    %103 = arith.select %101, %17, %102 : vector<128x128xi1>, vector<128x128xf32>
    %cst_48 = arith.constant dense<0x7F800000> : vector<128xf32>
    %104 = vector.multi_reduction <minimumf>, %103, %cst_48 [0] : vector<128x128xf32> to vector<128xf32>
    %105 = vector.shape_cast %104 : vector<128xf32> to vector<1x128xf32>
    %106 = arith.fptosi %105 : vector<1x128xf32> to vector<1x128xi32>
    %c0_49 = arith.constant 0 : index
    %c5 = arith.constant 5 : index
    %c0_50 = arith.constant 0 : index
    %c0_51 = arith.constant 0 : index
    %107 = vector.load %arg5[%c0_49, %c5, %c0_50, %c0_51] : memref<1x6x1x128xi32, #tpu.memory_space<vmem>>, vector<1x1x1x128xi32>
    %108 = vector.shape_cast %107 : vector<1x1x1x128xi32> to vector<1x128xi32>
    %109 = vector.shape_cast %106 : vector<1x128xi32> to vector<1x1x1x128xi32>
    tpu.vector_store %arg5[%c0_49, %c5, %c0_50, %c0_51], %109 {strides = array<i32>} : memref<1x6x1x128xi32, #tpu.memory_space<vmem>>, vector<1x1x1x128xi32>,
    return
  }
  func.func @transform_0(%arg0: i32, %arg1: i32) -> (i32, i32, i32) {
    %c0_i32 = arith.constant 0 : i32
    %c0_i32_0 = arith.constant 0 : i32
    %c0_i32_1 = arith.constant 0 : i32
    return %arg0, %c0_i32, %c0_i32_0 : i32, i32, i32
  }
  func.func @transform_1(%arg0: i32, %arg1: i32) -> (i32, i32, i32) {
    %c0_i32 = arith.constant 0 : i32
    %c0_i32_0 = arith.constant 0 : i32
    return %arg0, %c0_i32, %arg1 : i32, i32, i32
  }
  func.func @transform_2(%arg0: i32, %arg1: i32) -> (i32, i32, i32) {
    %c0_i32 = arith.constant 0 : i32
    %c0_i32_0 = arith.constant 0 : i32
    %c0_i32_1 = arith.constant 0 : i32
    return %arg0, %c0_i32, %c0_i32_0 : i32, i32, i32
  }
  func.func @transform_3(%arg0: i32, %arg1: i32) -> (i32, i32, i32, i32) {
    %c0_i32 = arith.constant 0 : i32
    %c0_i32_0 = arith.constant 0 : i32
    %c0_i32_1 = arith.constant 0 : i32
    return %arg0, %c0_i32, %c0_i32_0, %arg1 : i32, i32, i32, i32
  }
}

module attributes {stable_mosaic.version = 11 : i64} {
  func.func @_edge_conv_max_kernel(%arg0: i32, %arg1: i32, %arg2: i32, %arg3: memref<1x8x128xf32, #tpu.memory_space<vmem>>, %arg4: memref<1x8x128xbf16, #tpu.memory_space<vmem>>, %arg5: memref<1x8x128xbf16, #tpu.memory_space<vmem>>, %arg6: memref<1x1x1x128xi32, #tpu.memory_space<vmem>>, %arg7: memref<8x8xf32, #tpu.memory_space<vmem>>, %arg8: memref<8x1xf32, #tpu.memory_space<vmem>>, %arg9: memref<1x8x128xf32, #tpu.memory_space<vmem>>) attributes {dimension_semantics = [#tpu.dimension_semantics<parallel>, #tpu.dimension_semantics<parallel>, #tpu.dimension_semantics<arbitrary>], iteration_bounds = array<i64: 2, 1, 6>, scalar_prefetch = 0 : i64, scratch_operands = 0 : i64, tpu.core_type = #tpu.core_type<tc>, window_params = [{transform_indices = @transform_0, window_bounds = array<i64: 1, 8, 128>}, {transform_indices = @transform_1, window_bounds = array<i64: 1, 8, 128>}, {transform_indices = @transform_2, window_bounds = array<i64: 1, 8, 128>}, {transform_indices = @transform_3, window_bounds = array<i64: 1, 1, 1, 128>}, {pipeline_mode = #tpu.pipeline_mode<synchronous>, transform_indices = @transform_4, window_bounds = array<i64: 8, 8>}, {pipeline_mode = #tpu.pipeline_mode<synchronous>, transform_indices = @transform_5, window_bounds = array<i64: 8, 1>}, {transform_indices = @transform_6, window_bounds = array<i64: 1, 8, 128>}]} {
    %c0 = arith.constant 0 : index
    %c0_0 = arith.constant 0 : index
    %c0_1 = arith.constant 0 : index
    %c0_2 = arith.constant 0 : index
    %0 = vector.load %arg6[%c0, %c0_0, %c0_1, %c0_2] : memref<1x1x1x128xi32, #tpu.memory_space<vmem>>, vector<1x1x1x128xi32>
    %1 = vector.shape_cast %0 : vector<1x1x1x128xi32> to vector<1x128xi32>
    %2 = tpu.iota {dimensions = array<i32: 0>} : vector<128x128xi32>
    %3 = vector.broadcast %1 : vector<1x128xi32> to vector<128x128xi32>
    %4 = arith.cmpi eq, %2, %3 : vector<128x128xi32>
    %5 = arith.extui %4 : vector<128x128xi1> to vector<128x128xi32>
    %6 = arith.sitofp %5 : vector<128x128xi32> to vector<128x128xf32>
    %7 = arith.truncf %6 : vector<128x128xf32> to vector<128x128xbf16>
    %c0_3 = arith.constant 0 : index
    %c0_4 = arith.constant 0 : index
    %c0_5 = arith.constant 0 : index
    %8 = vector.load %arg4[%c0_3, %c0_4, %c0_5] : memref<1x8x128xbf16, #tpu.memory_space<vmem>>, vector<1x8x128xbf16>
    %9 = vector.shape_cast %8 : vector<1x8x128xbf16> to vector<8x128xbf16>
    %cst = arith.constant dense<0.000000e+00> : vector<8x128xf32>
    %10 = tpu.matmul %9, %7, %cst {dimension_numbers = #tpu.dot_dimension_numbers<[1], [0], [0], [1], [0, 0, 1, 1], [], []>} : vector<8x128xbf16>, vector<128x128xbf16>, vector<8x128xf32> -> vector<8x128xf32>
    %c0_6 = arith.constant 0 : index
    %c0_7 = arith.constant 0 : index
    %c0_8 = arith.constant 0 : index
    %11 = vector.load %arg5[%c0_6, %c0_7, %c0_8] : memref<1x8x128xbf16, #tpu.memory_space<vmem>>, vector<1x8x128xbf16>
    %12 = vector.shape_cast %11 : vector<1x8x128xbf16> to vector<8x128xbf16>
    %cst_9 = arith.constant dense<0.000000e+00> : vector<8x128xf32>
    %13 = tpu.matmul %12, %7, %cst_9 {dimension_numbers = #tpu.dot_dimension_numbers<[1], [0], [0], [1], [0, 0, 1, 1], [], []>} : vector<8x128xbf16>, vector<128x128xbf16>, vector<8x128xf32> -> vector<8x128xf32>
    %14 = arith.addf %10, %13 : vector<8x128xf32>
    %c0_10 = arith.constant 0 : index
    %c0_11 = arith.constant 0 : index
    %c0_12 = arith.constant 0 : index
    %15 = vector.load %arg3[%c0_10, %c0_11, %c0_12] : memref<1x8x128xf32, #tpu.memory_space<vmem>>, vector<1x8x128xf32>
    %16 = vector.shape_cast %15 : vector<1x8x128xf32> to vector<8x128xf32>
    %17 = arith.subf %16, %14 : vector<8x128xf32>
    %cst_13 = arith.constant 0.000000e+00 : f32
    %18 = vector.broadcast %cst_13 : f32 to vector<8x128xf32>
    %19 = arith.maximumf %17, %18 : vector<8x128xf32>
    %c0_14 = arith.constant 0 : index
    %c0_15 = arith.constant 0 : index
    %20 = vector.load %arg7[%c0_14, %c0_15] : memref<8x8xf32, #tpu.memory_space<vmem>>, vector<8x8xf32>
    %cst_16 = arith.constant dense<0.000000e+00> : vector<8x128xf32>
    %21 = tpu.matmul %20, %19, %cst_16 {dimension_numbers = #tpu.dot_dimension_numbers<[1], [0], [0], [1], [0, 0, 1, 1], [], []>} : vector<8x8xf32>, vector<8x128xf32>, vector<8x128xf32> -> vector<8x128xf32>
    %c0_17 = arith.constant 0 : index
    %c0_18 = arith.constant 0 : index
    %22 = vector.load %arg8[%c0_17, %c0_18] : memref<8x1xf32, #tpu.memory_space<vmem>>, vector<8x1xf32>
    %23 = vector.broadcast %22 : vector<8x1xf32> to vector<8x128xf32>
    %24 = arith.addf %21, %23 : vector<8x128xf32>
    %cst_19 = arith.constant 0.000000e+00 : f32
    %25 = vector.broadcast %cst_19 : f32 to vector<8x128xf32>
    %26 = arith.maximumf %24, %25 : vector<8x128xf32>
    %c0_i32 = arith.constant 0 : i32
    %27 = arith.cmpi eq, %arg2, %c0_i32 : i32
    %28 = arith.extui %27 : i1 to i32
    %c0_i32_20 = arith.constant 0 : i32
    %29 = arith.cmpi ne, %28, %c0_i32_20 : i32
    scf.if %29 {
      %c0_23 = arith.constant 0 : index
      %c0_24 = arith.constant 0 : index
      %c0_25 = arith.constant 0 : index
      %33 = vector.load %arg9[%c0_23, %c0_24, %c0_25] : memref<1x8x128xf32, #tpu.memory_space<vmem>>, vector<1x8x128xf32>
      %34 = vector.shape_cast %33 : vector<1x8x128xf32> to vector<8x128xf32>
      %35 = vector.shape_cast %26 : vector<8x128xf32> to vector<1x8x128xf32>
      tpu.vector_store %arg9[%c0_23, %c0_24, %c0_25], %35 {strides = array<i32>} : memref<1x8x128xf32, #tpu.memory_space<vmem>>, vector<1x8x128xf32>,
    } else {
    }
    %c0_i32_21 = arith.constant 0 : i32
    %30 = arith.cmpi sgt, %arg2, %c0_i32_21 : i32
    %31 = arith.extui %30 : i1 to i32
    %c0_i32_22 = arith.constant 0 : i32
    %32 = arith.cmpi ne, %31, %c0_i32_22 : i32
    scf.if %32 {
      %c0_23 = arith.constant 0 : index
      %c0_24 = arith.constant 0 : index
      %c0_25 = arith.constant 0 : index
      %33 = vector.load %arg9[%c0_23, %c0_24, %c0_25] : memref<1x8x128xf32, #tpu.memory_space<vmem>>, vector<1x8x128xf32>
      %34 = vector.shape_cast %33 : vector<1x8x128xf32> to vector<8x128xf32>
      %35 = arith.maximumf %34, %26 : vector<8x128xf32>
      %c0_26 = arith.constant 0 : index
      %c0_27 = arith.constant 0 : index
      %c0_28 = arith.constant 0 : index
      %36 = vector.load %arg9[%c0_26, %c0_27, %c0_28] : memref<1x8x128xf32, #tpu.memory_space<vmem>>, vector<1x8x128xf32>
      %37 = vector.shape_cast %36 : vector<1x8x128xf32> to vector<8x128xf32>
      %38 = vector.shape_cast %35 : vector<8x128xf32> to vector<1x8x128xf32>
      tpu.vector_store %arg9[%c0_26, %c0_27, %c0_28], %38 {strides = array<i32>} : memref<1x8x128xf32, #tpu.memory_space<vmem>>, vector<1x8x128xf32>,
    } else {
    }
    return
  }
  func.func @transform_0(%arg0: i32, %arg1: i32, %arg2: i32) -> (i32, i32, i32) {
    %c0_i32 = arith.constant 0 : i32
    %c0_i32_0 = arith.constant 0 : i32
    return %arg0, %c0_i32, %arg1 : i32, i32, i32
  }
  func.func @transform_1(%arg0: i32, %arg1: i32, %arg2: i32) -> (i32, i32, i32) {
    %c0_i32 = arith.constant 0 : i32
    %c0_i32_0 = arith.constant 0 : i32
    %c0_i32_1 = arith.constant 0 : i32
    return %arg0, %c0_i32, %c0_i32_0 : i32, i32, i32
  }
  func.func @transform_2(%arg0: i32, %arg1: i32, %arg2: i32) -> (i32, i32, i32) {
    %c0_i32 = arith.constant 0 : i32
    %c0_i32_0 = arith.constant 0 : i32
    %c0_i32_1 = arith.constant 0 : i32
    return %arg0, %c0_i32, %c0_i32_0 : i32, i32, i32
  }
  func.func @transform_3(%arg0: i32, %arg1: i32, %arg2: i32) -> (i32, i32, i32, i32) {
    %c0_i32 = arith.constant 0 : i32
    %c0_i32_0 = arith.constant 0 : i32
    return %arg0, %arg2, %c0_i32, %arg1 : i32, i32, i32, i32
  }
  func.func @transform_4(%arg0: i32, %arg1: i32, %arg2: i32) -> (i32, i32) {
    %c0_i32 = arith.constant 0 : i32
    %c0_i32_0 = arith.constant 0 : i32
    %c0_i32_1 = arith.constant 0 : i32
    return %c0_i32, %c0_i32_0 : i32, i32
  }
  func.func @transform_5(%arg0: i32, %arg1: i32, %arg2: i32) -> (i32, i32) {
    %c0_i32 = arith.constant 0 : i32
    %c0_i32_0 = arith.constant 0 : i32
    %c0_i32_1 = arith.constant 0 : i32
    return %c0_i32, %c0_i32_0 : i32, i32
  }
  func.func @transform_6(%arg0: i32, %arg1: i32, %arg2: i32) -> (i32, i32, i32) {
    %c0_i32 = arith.constant 0 : i32
    %c0_i32_0 = arith.constant 0 : i32
    return %arg0, %c0_i32, %arg1 : i32, i32, i32
  }
}

</mosaic_0001>

<llo_original>
// kernel: elgraph_block_forward.3
$region0: #{elgraph_block_forward.3}
  #allocation0 [shape = 'u32[]', space=smem, size = 0x4, offset = 0x4, fixed_abs, tag = 'smem constant byte address 0x4 - core index']
  #allocation1 [shape = 'u32[144,128]{1,0:T(1,128)}', space=vmem, size = 0x12000, scoped, tag = 'internal scratch']
  %s0 = inlined_call_operand.vmem [shape: f32[2,8,128], index: 0, kind: input, shape index: {}]
  %s1 = inlined_call_operand.vmem [shape: bf16[2,8,128], index: 1, kind: input, shape index: {}]
  %s2 = inlined_call_operand.vmem [shape: bf16[2,8,128], index: 2, kind: input, shape index: {}]
  %s3 = inlined_call_operand.vmem [shape: s32[2,6,1,128], index: 3, kind: input, shape index: {}]
  %s4 = inlined_call_operand.vmem [shape: f32[8,8], index: 4, kind: input, shape index: {}]
  %s5 = inlined_call_operand.vmem [shape: f32[8,1], index: 5, kind: input, shape index: {}]
  %s6 = inlined_call_operand.hbm [shape: f32[2,8,128], index: 6, kind: output, shape index: {}]
  %s7 = sld [smem:[#allocation0]]
  $region65: #{elgraph_block_forward.3} parent=0
    _
  %s9 = ssub.s32 1, %s7
  %s10 = scalar_select 0, %s9, %s7
  $region1: #{elgraph_block_forward.3} parent=0
    #allocation2 [shape = 'u8[8192]{0}', space=vmem, size = 0x2000, scoped, tag = 'output window, operand 0']
    #allocation3 [shape = 's32[2]{0}', space=sflag, size = 0x8, scoped, tag = 'scoped memory for elgraph_block_forward.3']
    %11 = vsyncpa [#allocation3], 0
    %s12 = scalar_lea.sflag [#allocation3], 1
    %13 = vsyncpa %s12, 0
    loop: start=0, step=1, limit=14
    $region2: #{elgraph_block_forward.3} parent=1 // loop_pre_header
      _
    $region3: #{elgraph_block_forward.3} parent=1 // loop_header
      %s15 = sphi 0, %s19
      %p16 = scmp.ge.s32.totalorder %s15, 14
      %s22 = sphi 0, %s41
      %s23 = sphi 0, %s37
      %s24 = sphi 0, %s33
      %s25 = sphi 0, %s22
      %s26 = sphi 0, %s23
      %s27 = sphi 0, %s24
      %s28 = sphi 0, %s25
      %s29 = sphi 0, %s26
      %s30 = sphi 0, %s27
      %s46 = sphi 0, %s48
      %s49 = sphi 0, %s46
      %s50 = sphi 0, %s49
      %s66 = sphi 0, %s50
      %s72 = sphi 0, %s74
      %s75 = sphi 0, %s72
      %s76 = sphi 0, %s75
      %s92 = sphi 0, %s76
      %s98 = sphi 0, %s100
      %s101 = sphi 0, %s98
      %s102 = sphi 0, %s101
      %s118 = sphi 0, %s102
      %s128 = sphi 0, %s130
      %s131 = sphi 0, %s128
      %s132 = sphi 0, %s131
      %s148 = sphi 0, %s132
      %s152 = sphi 0, %s152
      %s154 = sphi 0, %s152
      %s155 = sphi 0, %s154
      %s169 = sphi 0, %s155
      %s173 = sphi 0, %s173
      %s175 = sphi 0, %s173
      %s176 = sphi 0, %s175
      %s190 = sphi 0, %s176
      %s198 = sphi 0, %s200
      %s201 = sphi 0, %s198
      %s202 = sphi 0, %s201
      %s218 = sphi 0, %s202
    $region4: #{elgraph_block_forward.3} parent=1 // loop_header_branch
      %18 = sbr.rel (%p16) target = $region8
    $region5: #{elgraph_block_forward.3} parent=1 // loop_body
      %s20 = ssub.s32 %s15, 1
      %s21 = ssub.s32 %s15, 2
      %s31 = sadd.s32 1, %s24
      %p32 = scmp.ge.s32.totalorder %s31, 6
      %s33 = scalar_select %p32, 0, %s31
      %s34 = sadd.s32 1, %s23
      %s35 = scalar_select %p32, %s34, %s23
      %p36 = scmp.ge.s32.totalorder %s35, 1
      %s37 = scalar_select %p36, 0, %s35
      %s38 = sadd.s32 1, %s22
      %s39 = scalar_select %p36, %s38, %s22
      %p40 = scmp.ge.s32.totalorder %s39, 2
      %s41 = scalar_select %p40, 0, %s39
      %s42 = ssub.s32 %s22, %s41
      %s43 = ssub.s32 %s23, %s37
      %s44 = sor.u32 %s42, %s43
      %p45 = scmp.eq.s32.totalorder %s44, 0
      %s47 = sadd.s32 %s46, 1
      %s48 = scalar_select %p45, %s46, %s47
      %p51 = pneg %p45
      %p52 = scmp.eq.s32.totalorder %s15, 11
      %p53 = por %p51, %p52
      %p54 = scmp.ne.s32.totalorder %s46, %s49
      %p55 = scmp.eq.s32.totalorder %s15, 0
      %p56 = por %p54, %p55
      %p57 = scmp.ne.s32.totalorder %s46, %s49
      %p58 = scmp.eq.s32.totalorder %s20, 11
      %p59 = por %p57, %p58
      %p60 = scmp.ne.s32.totalorder %s49, %s50
      %p61 = scmp.eq.s32.totalorder %s20, 0
      %p62 = por %p60, %p61
      %p63 = scmp.ne.s32.totalorder %s49, %s50
      %p64 = scmp.eq.s32.totalorder %s21, 11
      %p65 = por %p63, %p64
      %p67 = scmp.ne.s32.totalorder %s50, %s66
      %p68 = scmp.eq.s32.totalorder %s21, 0
      %p69 = por %p67, %p68
      %s70 = ssub.s32 %s22, %s41
      %p71 = scmp.eq.s32.totalorder %s70, 0
      %s73 = sadd.s32 %s72, 1
      %s74 = scalar_select %p71, %s72, %s73
      %p77 = pneg %p71
      %p78 = scmp.eq.s32.totalorder %s15, 11
      %p79 = por %p77, %p78
      %p80 = scmp.ne.s32.totalorder %s72, %s75
      %p81 = scmp.eq.s32.totalorder %s15, 0
      %p82 = por %p80, %p81
      %p83 = scmp.ne.s32.totalorder %s72, %s75
      %p84 = scmp.eq.s32.totalorder %s20, 11
      %p85 = por %p83, %p84
      %p86 = scmp.ne.s32.totalorder %s75, %s76
      %p87 = scmp.eq.s32.totalorder %s20, 0
      %p88 = por %p86, %p87
      %p89 = scmp.ne.s32.totalorder %s75, %s76
      %p90 = scmp.eq.s32.totalorder %s21, 11
      %p91 = por %p89, %p90
      %p93 = scmp.ne.s32.totalorder %s76, %s92
      %p94 = scmp.eq.s32.totalorder %s21, 0
      %p95 = por %p93, %p94
      %s96 = ssub.s32 %s22, %s41
      %p97 = scmp.eq.s32.totalorder %s96, 0
      %s99 = sadd.s32 %s98, 1
      %s100 = scalar_select %p97, %s98, %s99
      %p103 = pneg %p97
      %p104 = scmp.eq.s32.totalorder %s15, 11
      %p105 = por %p103, %p104
      %p106 = scmp.ne.s32.totalorder %s98, %s101
      %p107 = scmp.eq.s32.totalorder %s15, 0
      %p108 = por %p106, %p107
      %p109 = scmp.ne.s32.totalorder %s98, %s101
      %p110 = scmp.eq.s32.totalorder %s20, 11
      %p111 = por %p109, %p110
      %p112 = scmp.ne.s32.totalorder %s101, %s102
      %p113 = scmp.eq.s32.totalorder %s20, 0
      %p114 = por %p112, %p113
      %p115 = scmp.ne.s32.totalorder %s101, %s102
      %p116 = scmp.eq.s32.totalorder %s21, 11
      %p117 = por %p115, %p116
      %p119 = scmp.ne.s32.totalorder %s102, %s118
      %p120 = scmp.eq.s32.totalorder %s21, 0
      %p121 = por %p119, %p120
      %s122 = ssub.s32 %s22, %s41
      %s123 = ssub.s32 %s24, %s33
      %s124 = sor.u32 %s122, %s123
      %s125 = ssub.s32 %s23, %s37
      %s126 = sor.u32 %s124, %s125
      %p127 = scmp.eq.s32.totalorder %s126, 0
      %s129 = sadd.s32 %s128, 1
      %s130 = scalar_select %p127, %s128, %s129
      %p133 = pneg %p127
      %p134 = scmp.eq.s32.totalorder %s15, 11
      %p135 = por %p133, %p134
      %p136 = scmp.ne.s32.totalorder %s128, %s131
      %p137 = scmp.eq.s32.totalorder %s15, 0
      %p138 = por %p136, %p137
      %p139 = scmp.ne.s32.totalorder %s128, %s131
      %p140 = scmp.eq.s32.totalorder %s20, 11
      %p141 = por %p139, %p140
      %p142 = scmp.ne.s32.totalorder %s131, %s132
      %p143 = scmp.eq.s32.totalorder %s20, 0
      %p144 = por %p142, %p143
      %p145 = scmp.ne.s32.totalorder %s131, %s132
      %p146 = scmp.eq.s32.totalorder %s21, 11
      %p147 = por %p145, %p146
      %p149 = scmp.ne.s32.totalorder %s132, %s148
      %p150 = scmp.eq.s32.totalorder %s21, 0
      %p151 = por %p149, %p150
      %s153 = sadd.s32 %s152, 1
      %p156 = scmp.eq.s32.totalorder %s15, 11
      %p157 = scmp.ne.s32.totalorder %s152, %s154
      %p158 = scmp.eq.s32.totalorder %s15, 0
      %p159 = por %p157, %p158
      %p160 = scmp.ne.s32.totalorder %s152, %s154
      %p161 = scmp.eq.s32.totalorder %s20, 11
      %p162 = por %p160, %p161
      %p163 = scmp.ne.s32.totalorder %s154, %s155
      %p164 = scmp.eq.s32.totalorder %s20, 0
      %p165 = por %p163, %p164
      %p166 = scmp.ne.s32.totalorder %s154, %s155
      %p167 = scmp.eq.s32.totalorder %s21, 11
      %p168 = por %p166, %p167
      %p170 = scmp.ne.s32.totalorder %s155, %s169
      %p171 = scmp.eq.s32.totalorder %s21, 0
      %p172 = por %p170, %p171
      %s174 = sadd.s32 %s173, 1
      %p177 = scmp.eq.s32.totalorder %s15, 11
      %p178 = scmp.ne.s32.totalorder %s173, %s175
      %p179 = scmp.eq.s32.totalorder %s15, 0
      %p180 = por %p178, %p179
      %p181 = scmp.ne.s32.totalorder %s173, %s175
      %p182 = scmp.eq.s32.totalorder %s20, 11
      %p183 = por %p181, %p182
      %p184 = scmp.ne.s32.totalorder %s175, %s176
      %p185 = scmp.eq.s32.totalorder %s20, 0
      %p186 = por %p184, %p185
      %p187 = scmp.ne.s32.totalorder %s175, %s176
      %p188 = scmp.eq.s32.totalorder %s21, 11
      %p189 = por %p187, %p188
      %p191 = scmp.ne.s32.totalorder %s176, %s190
      %p192 = scmp.eq.s32.totalorder %s21, 0
      %p193 = por %p191, %p192
      %s194 = ssub.s32 %s22, %s41
      %s195 = ssub.s32 %s23, %s37
      %s196 = sor.u32 %s194, %s195
      %p197 = scmp.eq.s32.totalorder %s196, 0
      %s199 = sadd.s32 %s198, 1
      %s200 = scalar_select %p197, %s198, %s199
      %p203 = pneg %p197
      %p204 = scmp.eq.s32.totalorder %s15, 11
      %p205 = por %p203, %p204
      %p206 = scmp.ne.s32.totalorder %s198, %s201
      %p207 = scmp.eq.s32.totalorder %s15, 0
      %p208 = por %p206, %p207
      %p209 = scmp.ne.s32.totalorder %s198, %s201
      %p210 = scmp.eq.s32.totalorder %s20, 11
      %p211 = por %p209, %p210
      %p212 = scmp.ne.s32.totalorder %s201, %s202
      %p213 = scmp.eq.s32.totalorder %s20, 0
      %p214 = por %p212, %p213
      %p215 = scmp.ne.s32.totalorder %s201, %s202
      %p216 = scmp.eq.s32.totalorder %s21, 11
      %p217 = por %p215, %p216
      %p219 = scmp.ne.s32.totalorder %s202, %s218
      %p220 = scmp.eq.s32.totalorder %s21, 0
      %p221 = por %p219, %p220
      %p222 = scmp.le.s32.totalorder 1, %s15
      %p223 = scmp.lt.s32.totalorder %s15, 13
      %p224 = pnand %p222, %p223
      %p225 = pneg %p224
      // Predicated region
      $region9: #{elgraph_block_forward.3} parent=5 // pred_check
        _
      $region10: #{elgraph_block_forward.3} parent=5 // pred_check_branch
        %227 = sbr.rel (%p224) target = $region12
      $region11: #{elgraph_block_forward.3} parent=5 // pred_region
        %s228 = ssub.s32 %s15, 1
        // Predicated region
        $region13: #{elgraph_block_forward.3} parent=11 // pred_check
          %p229 = pneg %p165
        $region14: #{elgraph_block_forward.3} parent=11 // pred_check_branch
          %231 = sbr.rel (%p229) target = $region16
        $region15: #{elgraph_block_forward.3} parent=11 // pred_region
          _
        $region16: #{elgraph_block_forward.3} parent=11 // pred_fallthru
          _
        // Predicated region
        $region17: #{elgraph_block_forward.3} parent=11 // pred_check
          %p232 = pneg %p186
        $region18: #{elgraph_block_forward.3} parent=11 // pred_check_branch
          %234 = sbr.rel (%p232) target = $region20
        $region19: #{elgraph_block_forward.3} parent=11 // pred_region
          _
        $region20: #{elgraph_block_forward.3} parent=11 // pred_fallthru
          _
      $region12: #{elgraph_block_forward.3} parent=5 // pred_fallthru
        _
      %p235 = scmp.lt.s32.totalorder %s15, 12
      // Predicated region
      $region21: #{elgraph_block_forward.3} parent=5 // pred_check
        %p236 = pneg %p235
      $region22: #{elgraph_block_forward.3} parent=5 // pred_check_branch
        %238 = sbr.rel (%p236) target = $region24
      $region23: #{elgraph_block_forward.3} parent=5 // pred_region
        // Predicated region
        $region25: #{elgraph_block_forward.3} parent=23 // pred_check
          %p239 = pneg %p56
        $region26: #{elgraph_block_forward.3} parent=23 // pred_check_branch
          %241 = sbr.rel (%p239) target = $region28
        $region27: #{elgraph_block_forward.3} parent=23 // pred_region
          %p242 = scmp.lt.s32.totalorder %s22, 1
          %s243 = scalar_select %p242, %s22, 1
          %p244 = scmp.lt.s32.totalorder %s23, 0
          %s245 = scalar_select %p244, %s23, 0
          %s246 = sadd.s32 %s245, %s243
          %s247 = smul.addr %s246, 8
          %s248 = scalar_lea.vmem %s0, %s247
        $region28: #{elgraph_block_forward.3} parent=23 // pred_fallthru
          _
        // Predicated region
        $region29: #{elgraph_block_forward.3} parent=23 // pred_check
          %p249 = pneg %p82
        $region30: #{elgraph_block_forward.3} parent=23 // pred_check_branch
          %251 = sbr.rel (%p249) target = $region32
        $region31: #{elgraph_block_forward.3} parent=23 // pred_region
          %p252 = scmp.lt.s32.totalorder %s22, 1
          %s253 = scalar_select %p252, %s22, 1
          %s254 = smul.addr %s253, 4
          %s255 = scalar_lea.vmem %s1, %s254
        $region32: #{elgraph_block_forward.3} parent=23 // pred_fallthru
          _
        // Predicated region
        $region33: #{elgraph_block_forward.3} parent=23 // pred_check
          %p256 = pneg %p108
        $region34: #{elgraph_block_forward.3} parent=23 // pred_check_branch
          %258 = sbr.rel (%p256) target = $region36
        $region35: #{elgraph_block_forward.3} parent=23 // pred_region
          %p259 = scmp.lt.s32.totalorder %s22, 1
          %s260 = scalar_select %p259, %s22, 1
          %s261 = smul.addr %s260, 4
          %s262 = scalar_lea.vmem %s2, %s261
        $region36: #{elgraph_block_forward.3} parent=23 // pred_fallthru
          _
        // Predicated region
        $region37: #{elgraph_block_forward.3} parent=23 // pred_check
          %p263 = pneg %p138
        $region38: #{elgraph_block_forward.3} parent=23 // pred_check_branch
          %265 = sbr.rel (%p263) target = $region40
        $region39: #{elgraph_block_forward.3} parent=23 // pred_region
          %p266 = scmp.lt.s32.totalorder %s22, 1
          %s267 = scalar_select %p266, %s22, 1
          %p268 = scmp.lt.s32.totalorder %s24, 5
          %s269 = scalar_select %p268, %s24, 5
          %p270 = scmp.lt.s32.totalorder %s23, 0
          %s271 = scalar_select %p270, %s23, 0
          %s272 = sadd.s32 %s271, %s269
          %s273 = smul.addr %s267, 6
          %s274 = sadd.s32 %s272, %s273
          %s275 = scalar_lea.vmem %s3, %s274
        $region40: #{elgraph_block_forward.3} parent=23 // pred_fallthru
          _
      $region24: #{elgraph_block_forward.3} parent=5 // pred_fallthru
        _
      %p276 = scmp.le.s32.totalorder 1, %s15
      %p277 = scmp.lt.s32.totalorder %s15, 13
      %p278 = pnand %p276, %p277
      %p279 = pneg %p278
      // Predicated region
      $region41: #{elgraph_block_forward.3} parent=5 // pred_check
        _
      $region42: #{elgraph_block_forward.3} parent=5 // pred_check_branch
        %281 = sbr.rel (%p278) target = $region44
      $region43: #{elgraph_block_forward.3} parent=5 // pred_region
        %s282 = ssub.s32 %s15, 1
        %p283 = scmp.lt.s32.totalorder %s25, 1
        %s284 = scalar_select %p283, %s25, 1
        %p285 = scmp.lt.s32.totalorder %s26, 0
        %s286 = scalar_select %p285, %s26, 0
        %s287 = sadd.s32 %s286, %s284
        %s288 = smul.addr %s287, 8
        %s289 = scalar_lea.vmem %s0, %s288
        %p290 = pneg %p62
        %p291 = pneg %p59
        %p292 = scmp.lt.s32.totalorder %s25, 1
        %s293 = scalar_select %p292, %s25, 1
        %s294 = smul.addr %s293, 4
        %s295 = scalar_lea.vmem %s1, %s294
        %p296 = pneg %p88
        %p297 = pneg %p85
        %p298 = scmp.lt.s32.totalorder %s25, 1
        %s299 = scalar_select %p298, %s25, 1
        %s300 = smul.addr %s299, 4
        %s301 = scalar_lea.vmem %s2, %s300
        %p302 = pneg %p114
        %p303 = pneg %p111
        %p304 = scmp.lt.s32.totalorder %s25, 1
        %s305 = scalar_select %p304, %s25, 1
        %p306 = scmp.lt.s32.totalorder %s27, 5
        %s307 = scalar_select %p306, %s27, 5
        %p308 = scmp.lt.s32.totalorder %s26, 0
        %s309 = scalar_select %p308, %s26, 0
        %s310 = sadd.s32 %s309, %s307
        %s311 = smul.addr %s305, 6
        %s312 = sadd.s32 %s310, %s311
        %s313 = scalar_lea.vmem %s3, %s312
        %p314 = pneg %p144
        %p315 = pneg %p141
        %p316 = pneg %p165
        %p317 = pneg %p162
        %p318 = pneg %p186
        %p319 = pneg %p183
        %p320 = pneg %p214
        %p321 = pneg %p211
        %s322 = sand.u32 %s201, 1
        %s323 = scalar_lea.sflag [#allocation3], %s322
        %s324 = sand.u32 %s201, 1
        %s325 = smul.addr %s324, 8
        %s326 = scalar_lea.vmem [#allocation2], %s325
        %p327 = scmp.lt.s32.totalorder %s25, 1
        %s328 = scalar_select %p327, %s25, 1
        %p329 = scmp.lt.s32.totalorder %s26, 0
        %s330 = scalar_select %p329, %s26, 0
        %s331 = sadd.s32 %s330, %s328
        %s332 = smul.addr %s331, 8
        %s333 = scalar_lea.vmem %s0, %s332
        %p334 = scmp.lt.s32.totalorder %s25, 1
        %s335 = scalar_select %p334, %s25, 1
        %s336 = smul.addr %s335, 4
        %s337 = scalar_lea.vmem %s1, %s336
        %p338 = scmp.lt.s32.totalorder %s25, 1
        %s339 = scalar_select %p338, %s25, 1
        %s340 = smul.addr %s339, 4
        %s341 = scalar_lea.vmem %s2, %s340
        %p342 = scmp.lt.s32.totalorder %s25, 1
        %s343 = scalar_select %p342, %s25, 1
        %p344 = scmp.lt.s32.totalorder %s27, 5
        %s345 = scalar_select %p344, %s27, 5
        %p346 = scmp.lt.s32.totalorder %s26, 0
        %s347 = scalar_select %p346, %s26, 0
        %s348 = sadd.s32 %s347, %s345
        %s349 = smul.addr %s343, 6
        %s350 = sadd.s32 %s348, %s349
        %s351 = scalar_lea.vmem %s3, %s350
        %v353 = vld [vmem:[%s351] sm:$0x1]
        %v354 = vlaneseq
        %v355 = vshrl.u32 %v354, 7
        %v356 = vadd.s32 %v355, 8
        %v357 = vadd.s32 %v355, 16
        %v358 = vadd.s32 %v355, 24
        %v359 = vadd.s32 %v355, 32
        %v360 = vadd.s32 %v355, 40
        %v361 = vadd.s32 %v355, 48
        %v362 = vadd.s32 %v355, 56
        %v363 = vadd.s32 %v355, 64
        %v364 = vadd.s32 %v355, 72
        %v365 = vadd.s32 %v355, 80
        %v366 = vadd.s32 %v355, 88
        %v367 = vadd.s32 %v355, 96
        %v368 = vadd.s32 %v355, 104
        %v369 = vadd.s32 %v355, 112
        %v370 = vadd.s32 %v355, 120
        %v371 = vlaneseq
        %v372 = vshrl.u32 %v371, 7
        %v373 = vsub.s32 0, %v372
        %v374 = vrot.slane %v353, %v373
        %vm375 = vcmp.eq.s32.totalorder %v355, %v374
        %vm376 = vcmp.eq.s32.totalorder %v356, %v374
        %vm377 = vcmp.eq.s32.totalorder %v357, %v374
        %vm378 = vcmp.eq.s32.totalorder %v358, %v374
        %vm379 = vcmp.eq.s32.totalorder %v359, %v374
        %vm380 = vcmp.eq.s32.totalorder %v360, %v374
        %vm381 = vcmp.eq.s32.totalorder %v361, %v374
        %vm382 = vcmp.eq.s32.totalorder %v362, %v374
        %vm383 = vcmp.eq.s32.totalorder %v363, %v374
        %vm384 = vcmp.eq.s32.totalorder %v364, %v374
        %vm385 = vcmp.eq.s32.totalorder %v365, %v374
        %vm386 = vcmp.eq.s32.totalorder %v366, %v374
        %vm387 = vcmp.eq.s32.totalorder %v367, %v374
        %vm388 = vcmp.eq.s32.totalorder %v368, %v374
        %vm389 = vcmp.eq.s32.totalorder %v369, %v374
        %vm390 = vcmp.eq.s32.totalorder %v370, %v374
        %v391 = vsel %vm375, 1, 0
        %v392 = vsel %vm376, 1, 0
        %v393 = vsel %vm377, 1, 0
        %v394 = vsel %vm378, 1, 0
        %v395 = vsel %vm379, 1, 0
        %v396 = vsel %vm380, 1, 0
        %v397 = vsel %vm381, 1, 0
        %v398 = vsel %vm382, 1, 0
        %v399 = vsel %vm383, 1, 0
        %v400 = vsel %vm384, 1, 0
        %v401 = vsel %vm385, 1, 0
        %v402 = vsel %vm386, 1, 0
        %v403 = vsel %vm387, 1, 0
        %v404 = vsel %vm388, 1, 0
        %v405 = vsel %vm389, 1, 0
        %v406 = vsel %vm390, 1, 0
        %v407 = vcvt.s32.f32 %v391
        %v408 = vcvt.s32.f32 %v392
        %v409 = vcvt.s32.f32 %v393
        %v410 = vcvt.s32.f32 %v394
        %v411 = vcvt.s32.f32 %v395
        %v412 = vcvt.s32.f32 %v396
        %v413 = vcvt.s32.f32 %v397
        %v414 = vcvt.s32.f32 %v398
        %v415 = vcvt.s32.f32 %v399
        %v416 = vcvt.s32.f32 %v400
        %v417 = vcvt.s32.f32 %v401
        %v418 = vcvt.s32.f32 %v402
        %v419 = vcvt.s32.f32 %v403
        %v420 = vcvt.s32.f32 %v404
        %v421 = vcvt.s32.f32 %v405
        %v422 = vcvt.s32.f32 %v406
        %v423 = vpack.c.bf16 %v408, %v407
        %v424 = vpack.c.bf16 %v410, %v409
        %v425 = vpack.c.bf16 %v412, %v411
        %v426 = vpack.c.bf16 %v414, %v413
        %v427 = vpack.c.bf16 %v416, %v415
        %v428 = vpack.c.bf16 %v418, %v417
        %v429 = vpack.c.bf16 %v420, %v419
        %v430 = vpack.c.bf16 %v422, %v421
        %v431 = vld [vmem:[%s337] sm:$0xf]
        %v432 = vld [vmem:[%s341] sm:$0xf]
        %433 = vmatprep.subr.bf16.mxu0 0
        %434 = vmatpush1.bf16.msra.mxu0 %v423
        %435 = vmatprep.subr.bf16.mxu0 0
        %436 = vmatpush1.bf16.msra.mxu0 %v424
        %437 = vmatprep.subr.bf16.mxu0 0
        %438 = vmatpush1.bf16.msra.mxu0 %v425
        %439 = vmatprep.subr.bf16.mxu0 0
        %440 = vmatpush1.bf16.msra.mxu0 %v426
        %441 = vmatprep.subr.bf16.mxu0 0
        %442 = vmatpush1.bf16.msra.mxu0 %v427
        %443 = vmatprep.subr.bf16.mxu0 0
        %444 = vmatpush1.bf16.msra.mxu0 %v428
        %445 = vmatprep.subr.bf16.mxu0 0
        %446 = vmatpush1.bf16.msra.mxu0 %v429
        %447 = vmatprep.subr.bf16.mxu0 0
        %448 = vmatpush1.bf16.msra.mxu0 %v430
        %449 = vmatprep.subr.bf16.mxu0 0
        %450 = vmatpush1.bf16.msra.mxu0 0
        %451 = vmatprep.subr.bf16.mxu0 0
        %452 = vmatpush1.bf16.msra.mxu0 0
        %453 = vmatprep.subr.bf16.mxu0 0
        %454 = vmatpush1.bf16.msra.mxu0 0
        %455 = vmatprep.subr.bf16.mxu0 0
        %456 = vmatpush1.bf16.msra.mxu0 0
        %457 = vmatprep.subr.bf16.mxu0 0
        %458 = vmatpush1.bf16.msra.mxu0 0
        %459 = vmatprep.subr.bf16.mxu0 0
        %460 = vmatpush1.bf16.msra.mxu0 0
        %461 = vmatprep.subr.bf16.mxu0 0
        %462 = vmatpush1.bf16.msra.mxu0 0
        %463 = vmatprep.subr.bf16.mxu0 0
        %464 = vmatpush1.bf16.msra.mxu0 0
        %465 = vmatprep.mubr.bf16.mxu0 0
        %466 = vmatmul.mubr.bf16.gmra.mrb[0].mxu0 %v432
        %v467 = vpop.f32.mrb[0].mxu0
        %v468 = vadd.f32 0.0, %v467
        %v469 = vpop.f32.mrb[0].mxu0
        %v470 = vpop.f32.mrb[0].mxu0
        %v471 = vpop.f32.mrb[0].mxu0
        %472 = vdwg.mxu0
        %473 = vmatprep.subr.bf16.mxu0 0
        %474 = vmatpush1.bf16.msra.mxu0 %v423
        %475 = vmatprep.subr.bf16.mxu0 0
        %476 = vmatpush1.bf16.msra.mxu0 %v424
        %477 = vmatprep.subr.bf16.mxu0 0
        %478 = vmatpush1.bf16.msra.mxu0 %v425
        %479 = vmatprep.subr.bf16.mxu0 0
        %480 = vmatpush1.bf16.msra.mxu0 %v426
        %481 = vmatprep.subr.bf16.mxu0 0
        %482 = vmatpush1.bf16.msra.mxu0 %v427
        %483 = vmatprep.subr.bf16.mxu0 0
        %484 = vmatpush1.bf16.msra.mxu0 %v428
        %485 = vmatprep.subr.bf16.mxu0 0
        %486 = vmatpush1.bf16.msra.mxu0 %v429
        %487 = vmatprep.subr.bf16.mxu0 0
        %488 = vmatpush1.bf16.msra.mxu0 %v430
        %489 = vmatprep.subr.bf16.mxu0 0
        %490 = vmatpush1.bf16.msra.mxu0 0
        %491 = vmatprep.subr.bf16.mxu0 0
        %492 = vmatpush1.bf16.msra.mxu0 0
        %493 = vmatprep.subr.bf16.mxu0 0
        %494 = vmatpush1.bf16.msra.mxu0 0
        %495 = vmatprep.subr.bf16.mxu0 0
        %496 = vmatpush1.bf16.msra.mxu0 0
        %497 = vmatprep.subr.bf16.mxu0 0
        %498 = vmatpush1.bf16.msra.mxu0 0
        %499 = vmatprep.subr.bf16.mxu0 0
        %500 = vmatpush1.bf16.msra.mxu0 0
        %501 = vmatprep.subr.bf16.mxu0 0
        %502 = vmatpush1.bf16.msra.mxu0 0
        %503 = vmatprep.subr.bf16.mxu0 0
        %504 = vmatpush1.bf16.msra.mxu0 0
        %505 = vmatprep.mubr.bf16.mxu0 0
        %506 = vmatmul.mubr.bf16.gmra.mrb[0].mxu0 %v431
        %v507 = vpop.f32.mrb[0].mxu0
        %v508 = vadd.f32 %v468, %v507
        %v509 = vpop.f32.mrb[0].mxu0
        %v510 = vpop.f32.mrb[0].mxu0
        %v511 = vpop.f32.mrb[0].mxu0
        %512 = vdwg.mxu0
        %v513 = vld [vmem:[%s333] sm:$0xff]
        %v514 = vsub.f32 %v513, %v508
        %v515 = vmax.f32 %v514, 0.0
        %v516 = vld [vmem:[%s4] sm:$0xff]
        %v517 = vld [vmem:[%s5] sm:$0xff]
        %519 = vset.pattern.permute.xlu0 0
        %520 = vperm.xlu0 %519, %v517
        %v521 = vpop.permute.xlu0 %520
        %vm523 = vcmask 64512
        %v525 = vsel %vm523, %v516, 0
        %527 = vmatprep.subr.mxu0 0.0
        %528 = vmatpush1.msra.mxu0 %v515
        %529 = vmatprep.subr.mxu0 0.0
        %530 = vmatpush1.msra.mxu0 0.0
        %531 = vmatprep.subr.mxu0 0.0
        %532 = vmatpush1.msra.mxu0 0.0
        %533 = vmatprep.subr.mxu0 0.0
        %534 = vmatpush1.msra.mxu0 0.0
        %535 = vmatprep.subr.mxu0 0.0
        %536 = vmatpush1.msra.mxu0 0.0
        %537 = vmatprep.subr.mxu0 0.0
        %538 = vmatpush1.msra.mxu0 0.0
        %539 = vmatprep.subr.mxu0 0.0
        %540 = vmatpush1.msra.mxu0 0.0
        %541 = vmatprep.subr.mxu0 0.0
        %542 = vmatpush1.msra.mxu0 0.0
        %543 = vmatprep.subr.mxu0 0.0
        %544 = vmatpush1.msra.mxu0 0.0
        %545 = vmatprep.subr.mxu0 0.0
        %546 = vmatpush1.msra.mxu0 0.0
        %547 = vmatprep.subr.mxu0 0.0
        %548 = vmatpush1.msra.mxu0 0.0
        %549 = vmatprep.subr.mxu0 0.0
        %550 = vmatpush1.msra.mxu0 0.0
        %551 = vmatprep.subr.mxu0 0.0
        %552 = vmatpush1.msra.mxu0 0.0
        %553 = vmatprep.subr.mxu0 0.0
        %554 = vmatpush1.msra.mxu0 0.0
        %555 = vmatprep.subr.mxu0 0.0
        %556 = vmatpush1.msra.mxu0 0.0
        %557 = vmatprep.subr.mxu0 0.0
        %558 = vmatpush1.msra.mxu0 0.0
        %559 = vmatprep.subr.mxu0 0.0
        %560 = vmatpush1.msra.mxu0 0.0
        %561 = vmatprep.subr.mxu0 0.0
        %562 = vmatpush1.msra.mxu0 0.0
        %563 = vmatprep.subr.mxu0 0.0
        %564 = vmatpush1.msra.mxu0 0.0
        %565 = vmatprep.subr.mxu0 0.0
        %566 = vmatpush1.msra.mxu0 0.0
        %567 = vmatprep.subr.mxu0 0.0
        %568 = vmatpush1.msra.mxu0 0.0
        %569 = vmatprep.subr.mxu0 0.0
        %570 = vmatpush1.msra.mxu0 0.0
        %571 = vmatprep.subr.mxu0 0.0
        %572 = vmatpush1.msra.mxu0 0.0
        %573 = vmatprep.subr.mxu0 0.0
        %574 = vmatpush1.msra.mxu0 0.0
        %575 = vmatprep.subr.mxu0 0.0
        %576 = vmatpush1.msra.mxu0 0.0
        %577 = vmatprep.subr.mxu0 0.0
        %578 = vmatpush1.msra.mxu0 0.0
        %579 = vmatprep.subr.mxu0 0.0
        %580 = vmatpush1.msra.mxu0 0.0
        %581 = vmatprep.subr.mxu0 0.0
        %582 = vmatpush1.msra.mxu0 0.0
        %583 = vmatprep.subr.mxu0 0.0
        %584 = vmatpush1.msra.mxu0 0.0
        %585 = vmatprep.subr.mxu0 0.0
        %586 = vmatpush1.msra.mxu0 0.0
        %587 = vmatprep.subr.mxu0 0.0
        %588 = vmatpush1.msra.mxu0 0.0
        %589 = vmatprep.subr.mxu0 0.0
        %590 = vmatpush1.msra.mxu0 0.0
        %591 = vmatprep.mubr.f32.mxu0 0.0
        %592 = vmatmul.mubr.f32.gmra.mrb[0].mxu0 %v525
        %v593 = vpop.f32.mrb[0].mxu0
        %v594 = vadd.f32 %v521, %v593
        %v595 = vpop.f32.mrb[0].mxu0
        %596 = vdwg.mxu0
        %v597 = vmax.f32 %v594, 0.0
        %p598 = scmp.eq.s32.totalorder %s27, 0
        // Predicated region
        $region45: #{elgraph_block_forward.3} parent=43 // pred_check
          %p599 = pneg %p598
        $region46: #{elgraph_block_forward.3} parent=43 // pred_check_branch
          %601 = sbr.rel (%p599) target = $region48
        $region47: #{elgraph_block_forward.3} parent=43 // pred_region
          %602 = vst [vmem:[%s326] sm:$0xff] %v597
        $region48: #{elgraph_block_forward.3} parent=43 // pred_fallthru
          _
        %p603 = scmp.gt.s32.totalorder %s27, 0
        // Predicated region
        $region49: #{elgraph_block_forward.3} parent=43 // pred_check
          %p604 = pneg %p603
        $region50: #{elgraph_block_forward.3} parent=43 // pred_check_branch
          %606 = sbr.rel (%p604) target = $region52
        $region51: #{elgraph_block_forward.3} parent=43 // pred_region
          %v607 = vld [vmem:[%s326] sm:$0xff]
          %v608 = vmax.f32 %v607, %v597
          %609 = vst [vmem:[%s326] sm:$0xff] %v608
        $region52: #{elgraph_block_forward.3} parent=43 // pred_fallthru
          _
        %s610 = sand.u32 %s201, 1
        %s611 = scalar_lea.sflag [#allocation3], %s610
        %s612 = sand.u32 %s201, 1
        %s613 = smul.addr %s612, 8
        %s614 = scalar_lea.vmem [#allocation2], %s613
        // Predicated region
        $region53: #{elgraph_block_forward.3} parent=43 // pred_check
          %p615 = pneg %p211
        $region54: #{elgraph_block_forward.3} parent=43 // pred_check_branch
          %617 = sbr.rel (%p615) target = $region56
        $region55: #{elgraph_block_forward.3} parent=43 // pred_region
          %s619 = ssub.s32 128, 128
          %620 = vsyncadd %s611, %s619
          %s621 = sadd.s32 %s26, %s25
          %s622 = smul.addr %s621, 128
          %s623 = scalar_lea.hbm %s6, %s622
          %s625 = sshll.u32 %s614, 4
          %s626 = int_to_ptr.vmem [resolvable:$true] %s625
          %628 = dma.vmem_to_hbm [thread:$0]  %s626, 128, %s623, %s611
        $region56: #{elgraph_block_forward.3} parent=43 // pred_fallthru
          _
      $region44: #{elgraph_block_forward.3} parent=5 // pred_fallthru
        _
      %p629 = scmp.le.s32.totalorder 2, %s15
      // Predicated region
      $region57: #{elgraph_block_forward.3} parent=5 // pred_check
        %p630 = pneg %p629
      $region58: #{elgraph_block_forward.3} parent=5 // pred_check_branch
        %632 = sbr.rel (%p630) target = $region60
      $region59: #{elgraph_block_forward.3} parent=5 // pred_region
        %s633 = ssub.s32 %s15, 2
        // Predicated region
        $region61: #{elgraph_block_forward.3} parent=59 // pred_check
          %p634 = pneg %p217
        $region62: #{elgraph_block_forward.3} parent=59 // pred_check_branch
          %636 = sbr.rel (%p634) target = $region64
        $region63: #{elgraph_block_forward.3} parent=59 // pred_region
          %s637 = sand.u32 %s202, 1
          %s638 = scalar_lea.sflag [#allocation3], %s637
          %s639 = sand.u32 %s202, 1
          %s640 = smul.addr %s639, 8
          %s641 = scalar_lea.vmem [#allocation2], %s640
          %642 = dma.done %s638, 128
        $region64: #{elgraph_block_forward.3} parent=59 // pred_fallthru
          _
      $region60: #{elgraph_block_forward.3} parent=5 // pred_fallthru
        _
    $region6: #{elgraph_block_forward.3} parent=1 // loop_footer
      %s19 = sadd.s32 1, %s15
    $region7: #{elgraph_block_forward.3} parent=1 // loop_footer_branch
      %14 = sbr.rel target = $region3
    $region8: #{elgraph_block_forward.3} parent=1 // loop_exit
      _
    %643 = vsyncpa [#allocation3], 1
    %s644 = scalar_lea.sflag [#allocation3], 1
    %645 = vsyncpa %s644, 1

// kernel: elgraph_block_forward.2
$region0: #{elgraph_block_forward.2}
  #allocation0 [shape = 'u32[]', space=smem, size = 0x4, offset = 0x4, fixed_abs, tag = 'smem constant byte address 0x4 - core index']
  #allocation1 [shape = 'u32[144,128]{1,0:T(1,128)}', space=vmem, size = 0x12000, scoped, tag = 'internal scratch']
  %s0 = inlined_call_operand.vmem [shape: f32[2,128,8], index: 0, kind: input, shape index: {}]
  %s1 = inlined_call_operand.vmem [shape: f32[2,8,128], index: 1, kind: input, shape index: {}]
  %s2 = inlined_call_operand.vmem [shape: f32[2,128,1], index: 2, kind: input, shape index: {}]
  %s3 = inlined_call_operand.vmem [shape: s32[2,6,1,128], index: 3, kind: output, shape index: {}]
  %s4 = sld [smem:[#allocation0]]
  $region45: #{elgraph_block_forward.2} parent=0
    _
  %s6 = ssub.s32 1, %s4
  %s7 = scalar_select 0, %s6, %s4
  loop: start=0, step=1, limit=4
  $region2: #{elgraph_block_forward.2} parent=0 // loop_pre_header
    _
  $region3: #{elgraph_block_forward.2} parent=0 // loop_header
    %s9 = sphi 0, %s13
    %p10 = scmp.ge.s32.totalorder %s9, 4
    %s16 = sphi 0, %s28
    %s17 = sphi 0, %s24
    %s18 = sphi 0, %s16
    %s19 = sphi 0, %s17
    %s20 = sphi 0, %s18
    %s21 = sphi 0, %s19
    %s31 = sphi 0, %s33
    %s34 = sphi 0, %s31
    %s35 = sphi 0, %s34
    %s51 = sphi 0, %s35
    %s59 = sphi 0, %s61
    %s62 = sphi 0, %s59
    %s63 = sphi 0, %s62
    %s79 = sphi 0, %s63
    %s85 = sphi 0, %s87
    %s88 = sphi 0, %s85
    %s89 = sphi 0, %s88
    %s105 = sphi 0, %s89
    %s113 = sphi 0, %s115
    %s116 = sphi 0, %s113
    %s117 = sphi 0, %s116
    %s133 = sphi 0, %s117
  $region4: #{elgraph_block_forward.2} parent=0 // loop_header_branch
    %12 = sbr.rel (%p10) target = $region8
  $region5: #{elgraph_block_forward.2} parent=0 // loop_body
    %s14 = ssub.s32 %s9, 1
    %s15 = ssub.s32 %s9, 2
    %s22 = sadd.s32 1, %s17
    %p23 = scmp.ge.s32.totalorder %s22, 1
    %s24 = scalar_select %p23, 0, %s22
    %s25 = sadd.s32 1, %s16
    %s26 = scalar_select %p23, %s25, %s16
    %p27 = scmp.ge.s32.totalorder %s26, 2
    %s28 = scalar_select %p27, 0, %s26
    %s29 = ssub.s32 %s16, %s28
    %p30 = scmp.eq.s32.totalorder %s29, 0
    %s32 = sadd.s32 %s31, 1
    %s33 = scalar_select %p30, %s31, %s32
    %p36 = pneg %p30
    %p37 = scmp.eq.s32.totalorder %s9, 1
    %p38 = por %p36, %p37
    %p39 = scmp.ne.s32.totalorder %s31, %s34
    %p40 = scmp.eq.s32.totalorder %s9, 0
    %p41 = por %p39, %p40
    %p42 = scmp.ne.s32.totalorder %s31, %s34
    %p43 = scmp.eq.s32.totalorder %s14, 1
    %p44 = por %p42, %p43
    %p45 = scmp.ne.s32.totalorder %s34, %s35
    %p46 = scmp.eq.s32.totalorder %s14, 0
    %p47 = por %p45, %p46
    %p48 = scmp.ne.s32.totalorder %s34, %s35
    %p49 = scmp.eq.s32.totalorder %s15, 1
    %p50 = por %p48, %p49
    %p52 = scmp.ne.s32.totalorder %s35, %s51
    %p53 = scmp.eq.s32.totalorder %s15, 0
    %p54 = por %p52, %p53
    %s55 = ssub.s32 %s16, %s28
    %s56 = ssub.s32 %s17, %s24
    %s57 = sor.u32 %s55, %s56
    %p58 = scmp.eq.s32.totalorder %s57, 0
    %s60 = sadd.s32 %s59, 1
    %s61 = scalar_select %p58, %s59, %s60
    %p64 = pneg %p58
    %p65 = scmp.eq.s32.totalorder %s9, 1
    %p66 = por %p64, %p65
    %p67 = scmp.ne.s32.totalorder %s59, %s62
    %p68 = scmp.eq.s32.totalorder %s9, 0
    %p69 = por %p67, %p68
    %p70 = scmp.ne.s32.totalorder %s59, %s62
    %p71 = scmp.eq.s32.totalorder %s14, 1
    %p72 = por %p70, %p71
    %p73 = scmp.ne.s32.totalorder %s62, %s63
    %p74 = scmp.eq.s32.totalorder %s14, 0
    %p75 = por %p73, %p74
    %p76 = scmp.ne.s32.totalorder %s62, %s63
    %p77 = scmp.eq.s32.totalorder %s15, 1
    %p78 = por %p76, %p77
    %p80 = scmp.ne.s32.totalorder %s63, %s79
    %p81 = scmp.eq.s32.totalorder %s15, 0
    %p82 = por %p80, %p81
    %s83 = ssub.s32 %s16, %s28
    %p84 = scmp.eq.s32.totalorder %s83, 0
    %s86 = sadd.s32 %s85, 1
    %s87 = scalar_select %p84, %s85, %s86
    %p90 = pneg %p84
    %p91 = scmp.eq.s32.totalorder %s9, 1
    %p92 = por %p90, %p91
    %p93 = scmp.ne.s32.totalorder %s85, %s88
    %p94 = scmp.eq.s32.totalorder %s9, 0
    %p95 = por %p93, %p94
    %p96 = scmp.ne.s32.totalorder %s85, %s88
    %p97 = scmp.eq.s32.totalorder %s14, 1
    %p98 = por %p96, %p97
    %p99 = scmp.ne.s32.totalorder %s88, %s89
    %p100 = scmp.eq.s32.totalorder %s14, 0
    %p101 = por %p99, %p100
    %p102 = scmp.ne.s32.totalorder %s88, %s89
    %p103 = scmp.eq.s32.totalorder %s15, 1
    %p104 = por %p102, %p103
    %p106 = scmp.ne.s32.totalorder %s89, %s105
    %p107 = scmp.eq.s32.totalorder %s15, 0
    %p108 = por %p106, %p107
    %s109 = ssub.s32 %s16, %s28
    %s110 = ssub.s32 %s17, %s24
    %s111 = sor.u32 %s109, %s110
    %p112 = scmp.eq.s32.totalorder %s111, 0
    %s114 = sadd.s32 %s113, 1
    %s115 = scalar_select %p112, %s113, %s114
    %p118 = pneg %p112
    %p119 = scmp.eq.s32.totalorder %s9, 1
    %p120 = por %p118, %p119
    %p121 = scmp.ne.s32.totalorder %s113, %s116
    %p122 = scmp.eq.s32.totalorder %s9, 0
    %p123 = por %p121, %p122
    %p124 = scmp.ne.s32.totalorder %s113, %s116
    %p125 = scmp.eq.s32.totalorder %s14, 1
    %p126 = por %p124, %p125
    %p127 = scmp.ne.s32.totalorder %s116, %s117
    %p128 = scmp.eq.s32.totalorder %s14, 0
    %p129 = por %p127, %p128
    %p130 = scmp.ne.s32.totalorder %s116, %s117
    %p131 = scmp.eq.s32.totalorder %s15, 1
    %p132 = por %p130, %p131
    %p134 = scmp.ne.s32.totalorder %s117, %s133
    %p135 = scmp.eq.s32.totalorder %s15, 0
    %p136 = por %p134, %p135
    %p137 = scmp.le.s32.totalorder 1, %s9
    %p138 = scmp.lt.s32.totalorder %s9, 3
    %p139 = pnand %p137, %p138
    %p140 = pneg %p139
    // Predicated region
    $region9: #{elgraph_block_forward.2} parent=5 // pred_check
      _
    $region10: #{elgraph_block_forward.2} parent=5 // pred_check_branch
      %142 = sbr.rel (%p139) target = $region12
    $region11: #{elgraph_block_forward.2} parent=5 // pred_region
      %s143 = ssub.s32 %s9, 1
    $region12: #{elgraph_block_forward.2} parent=5 // pred_fallthru
      _
    %p144 = scmp.lt.s32.totalorder %s9, 2
    // Predicated region
    $region13: #{elgraph_block_forward.2} parent=5 // pred_check
      %p145 = pneg %p144
    $region14: #{elgraph_block_forward.2} parent=5 // pred_check_branch
      %147 = sbr.rel (%p145) target = $region16
    $region15: #{elgraph_block_forward.2} parent=5 // pred_region
      // Predicated region
      $region17: #{elgraph_block_forward.2} parent=15 // pred_check
        %p148 = pneg %p41
      $region18: #{elgraph_block_forward.2} parent=15 // pred_check_branch
        %150 = sbr.rel (%p148) target = $region20
      $region19: #{elgraph_block_forward.2} parent=15 // pred_region
        %p151 = scmp.lt.s32.totalorder %s16, 1
        %s152 = scalar_select %p151, %s16, 1
        %s153 = smul.addr %s152, 16
        %s154 = smul.addr %s153, 8
        %s155 = scalar_lea.vmem %s0, %s154
      $region20: #{elgraph_block_forward.2} parent=15 // pred_fallthru
        _
      // Predicated region
      $region21: #{elgraph_block_forward.2} parent=15 // pred_check
        %p156 = pneg %p69
      $region22: #{elgraph_block_forward.2} parent=15 // pred_check_branch
        %158 = sbr.rel (%p156) target = $region24
      $region23: #{elgraph_block_forward.2} parent=15 // pred_region
        %p159 = scmp.lt.s32.totalorder %s16, 1
        %s160 = scalar_select %p159, %s16, 1
        %p161 = scmp.lt.s32.totalorder %s17, 0
        %s162 = scalar_select %p161, %s17, 0
        %s163 = sadd.s32 %s162, %s160
        %s164 = smul.addr %s163, 8
        %s165 = scalar_lea.vmem %s1, %s164
      $region24: #{elgraph_block_forward.2} parent=15 // pred_fallthru
        _
      // Predicated region
      $region25: #{elgraph_block_forward.2} parent=15 // pred_check
        %p166 = pneg %p95
      $region26: #{elgraph_block_forward.2} parent=15 // pred_check_branch
        %168 = sbr.rel (%p166) target = $region28
      $region27: #{elgraph_block_forward.2} parent=15 // pred_region
        %p169 = scmp.lt.s32.totalorder %s16, 1
        %s170 = scalar_select %p169, %s16, 1
        %s171 = smul.addr %s170, 16
        %s172 = smul.addr %s171, 8
        %s173 = scalar_lea.vmem %s2, %s172
      $region28: #{elgraph_block_forward.2} parent=15 // pred_fallthru
        _
    $region16: #{elgraph_block_forward.2} parent=5 // pred_fallthru
      _
    %p174 = scmp.le.s32.totalorder 1, %s9
    %p175 = scmp.lt.s32.totalorder %s9, 3
    %p176 = pnand %p174, %p175
    %p177 = pneg %p176
    // Predicated region
    $region29: #{elgraph_block_forward.2} parent=5 // pred_check
      _
    $region30: #{elgraph_block_forward.2} parent=5 // pred_check_branch
      %179 = sbr.rel (%p176) target = $region32
    $region31: #{elgraph_block_forward.2} parent=5 // pred_region
      %s180 = ssub.s32 %s9, 1
      %p181 = scmp.lt.s32.totalorder %s18, 1
      %s182 = scalar_select %p181, %s18, 1
      %s183 = smul.addr %s182, 16
      %s184 = smul.addr %s183, 8
      %s185 = scalar_lea.vmem %s0, %s184
      %p186 = pneg %p47
      %p187 = pneg %p44
      %p188 = scmp.lt.s32.totalorder %s18, 1
      %s189 = scalar_select %p188, %s18, 1
      %p190 = scmp.lt.s32.totalorder %s19, 0
      %s191 = scalar_select %p190, %s19, 0
      %s192 = sadd.s32 %s191, %s189
      %s193 = smul.addr %s192, 8
      %s194 = scalar_lea.vmem %s1, %s193
      %p195 = pneg %p75
      %p196 = pneg %p72
      %p197 = scmp.lt.s32.totalorder %s18, 1
      %s198 = scalar_select %p197, %s18, 1
      %s199 = smul.addr %s198, 16
      %s200 = smul.addr %s199, 8
      %s201 = scalar_lea.vmem %s2, %s200
      %p202 = pneg %p101
      %p203 = pneg %p98
      %p204 = pneg %p129
      %p205 = pneg %p126
      %p206 = scmp.lt.s32.totalorder %s18, 1
      %s207 = scalar_select %p206, %s18, 1
      %p208 = scmp.lt.s32.totalorder %s19, 0
      %s209 = scalar_select %p208, %s19, 0
      %s210 = smul.addr %s207, 6
      %s211 = sadd.s32 %s209, %s210
      %s212 = scalar_lea.vmem %s3, %s211
      %p213 = scmp.lt.s32.totalorder %s18, 1
      %s214 = scalar_select %p213, %s18, 1
      %s215 = smul.addr %s214, 16
      %s216 = smul.addr %s215, 8
      %s217 = scalar_lea.vmem %s0, %s216
      %p218 = scmp.lt.s32.totalorder %s18, 1
      %s219 = scalar_select %p218, %s18, 1
      %p220 = scmp.lt.s32.totalorder %s19, 0
      %s221 = scalar_select %p220, %s19, 0
      %s222 = sadd.s32 %s221, %s219
      %s223 = smul.addr %s222, 8
      %s224 = scalar_lea.vmem %s1, %s223
      %p225 = scmp.lt.s32.totalorder %s18, 1
      %s226 = scalar_select %p225, %s18, 1
      %s227 = smul.addr %s226, 16
      %s228 = smul.addr %s227, 8
      %s229 = scalar_lea.vmem %s2, %s228
      %p230 = scmp.lt.s32.totalorder %s18, 1
      %s231 = scalar_select %p230, %s18, 1
      %p232 = scmp.lt.s32.totalorder %s19, 0
      %s233 = scalar_select %p232, %s19, 0
      %s234 = smul.addr %s231, 6
      %s235 = sadd.s32 %s233, %s234
      %s236 = scalar_lea.vmem %s3, %s235
      %v237 = vld [vmem:[%s217] sm:$0xff]
      %v238 = vld [vmem:[%s217 + $0x8] sm:$0xff]
      %v239 = vld [vmem:[%s217 + $0x10] sm:$0xff]
      %v240 = vld [vmem:[%s217 + $0x18] sm:$0xff]
      %v241 = vld [vmem:[%s217 + $0x20] sm:$0xff]
      %v242 = vld [vmem:[%s217 + $0x28] sm:$0xff]
      %v243 = vld [vmem:[%s217 + $0x30] sm:$0xff]
      %v244 = vld [vmem:[%s217 + $0x38] sm:$0xff]
      %v245 = vld [vmem:[%s217 + $0x40] sm:$0xff]
      %v246 = vld [vmem:[%s217 + $0x48] sm:$0xff]
      %v247 = vld [vmem:[%s217 + $0x50] sm:$0xff]
      %v248 = vld [vmem:[%s217 + $0x58] sm:$0xff]
      %v249 = vld [vmem:[%s217 + $0x60] sm:$0xff]
      %v250 = vld [vmem:[%s217 + $0x68] sm:$0xff]
      %v251 = vld [vmem:[%s217 + $0x70] sm:$0xff]
      %v252 = vld [vmem:[%s217 + $0x78] sm:$0xff]
      %v253 = vld [vmem:[%s224] sm:$0xff]
      %vm254 = vcmask 64512
      %v256 = vsel %vm254, %v237, 0
      %v259 = vsel %vm254, %v238, 0
      %v262 = vsel %vm254, %v239, 0
      %v265 = vsel %vm254, %v240, 0
      %v268 = vsel %vm254, %v241, 0
      %v271 = vsel %vm254, %v242, 0
      %v274 = vsel %vm254, %v243, 0
      %v277 = vsel %vm254, %v244, 0
      %v280 = vsel %vm254, %v245, 0
      %v283 = vsel %vm254, %v246, 0
      %v286 = vsel %vm254, %v247, 0
      %v289 = vsel %vm254, %v248, 0
      %v292 = vsel %vm254, %v249, 0
      %v295 = vsel %vm254, %v250, 0
      %v298 = vsel %vm254, %v251, 0
      %v301 = vsel %vm254, %v252, 0
      %303 = vmatprep.subr.mxu0 0.0
      %304 = vmatpush1.msra.mxu0 %v253
      %305 = vmatprep.subr.mxu0 0.0
      %306 = vmatpush1.msra.mxu0 0.0
      %307 = vmatprep.subr.mxu0 0.0
      %308 = vmatpush1.msra.mxu0 0.0
      %309 = vmatprep.subr.mxu0 0.0
      %310 = vmatpush1.msra.mxu0 0.0
      %311 = vmatprep.subr.mxu0 0.0
      %312 = vmatpush1.msra.mxu0 0.0
      %313 = vmatprep.subr.mxu0 0.0
      %314 = vmatpush1.msra.mxu0 0.0
      %315 = vmatprep.subr.mxu0 0.0
      %316 = vmatpush1.msra.mxu0 0.0
      %317 = vmatprep.subr.mxu0 0.0
      %318 = vmatpush1.msra.mxu0 0.0
      %319 = vmatprep.subr.mxu0 0.0
      %320 = vmatpush1.msra.mxu0 0.0
      %321 = vmatprep.subr.mxu0 0.0
      %322 = vmatpush1.msra.mxu0 0.0
      %323 = vmatprep.subr.mxu0 0.0
      %324 = vmatpush1.msra.mxu0 0.0
      %325 = vmatprep.subr.mxu0 0.0
      %326 = vmatpush1.msra.mxu0 0.0
      %327 = vmatprep.subr.mxu0 0.0
      %328 = vmatpush1.msra.mxu0 0.0
      %329 = vmatprep.subr.mxu0 0.0
      %330 = vmatpush1.msra.mxu0 0.0
      %331 = vmatprep.subr.mxu0 0.0
      %332 = vmatpush1.msra.mxu0 0.0
      %333 = vmatprep.subr.mxu0 0.0
      %334 = vmatpush1.msra.mxu0 0.0
      %335 = vmatprep.subr.mxu0 0.0
      %336 = vmatpush1.msra.mxu0 0.0
      %337 = vmatprep.subr.mxu0 0.0
      %338 = vmatpush1.msra.mxu0 0.0
      %339 = vmatprep.subr.mxu0 0.0
      %340 = vmatpush1.msra.mxu0 0.0
      %341 = vmatprep.subr.mxu0 0.0
      %342 = vmatpush1.msra.mxu0 0.0
      %343 = vmatprep.subr.mxu0 0.0
      %344 = vmatpush1.msra.mxu0 0.0
      %345 = vmatprep.subr.mxu0 0.0
      %346 = vmatpush1.msra.mxu0 0.0
      %347 = vmatprep.subr.mxu0 0.0
      %348 = vmatpush1.msra.mxu0 0.0
      %349 = vmatprep.subr.mxu0 0.0
      %350 = vmatpush1.msra.mxu0 0.0
      %351 = vmatprep.subr.mxu0 0.0
      %352 = vmatpush1.msra.mxu0 0.0
      %353 = vmatprep.subr.mxu0 0.0
      %354 = vmatpush1.msra.mxu0 0.0
      %355 = vmatprep.subr.mxu0 0.0
      %356 = vmatpush1.msra.mxu0 0.0
      %357 = vmatprep.subr.mxu0 0.0
      %358 = vmatpush1.msra.mxu0 0.0
      %359 = vmatprep.subr.mxu0 0.0
      %360 = vmatpush1.msra.mxu0 0.0
      %361 = vmatprep.subr.mxu0 0.0
      %362 = vmatpush1.msra.mxu0 0.0
      %363 = vmatprep.subr.mxu0 0.0
      %364 = vmatpush1.msra.mxu0 0.0
      %365 = vmatprep.subr.mxu0 0.0
      %366 = vmatpush1.msra.mxu0 0.0
      %367 = vmatprep.mubr.f32.mxu0 0.0
      %368 = vmatmul.mubr.f32.gmra.mrb[0].mxu0 %v256
      %v369 = vpop.f32.mrb[0].mxu0
      %v370 = vadd.f32 0.0, %v369
      %v371 = vpop.f32.mrb[0].mxu0
      %372 = vmatprep.mubr.f32.mxu0 0.0
      %373 = vmatmul.mubr.f32.gmra.mrb[0].mxu0 %v259
      %v374 = vpop.f32.mrb[0].mxu0
      %v375 = vadd.f32 0.0, %v374
      %v376 = vpop.f32.mrb[0].mxu0
      %377 = vmatprep.mubr.f32.mxu0 0.0
      %378 = vmatmul.mubr.f32.gmra.mrb[0].mxu0 %v262
      %v379 = vpop.f32.mrb[0].mxu0
      %v380 = vadd.f32 0.0, %v379
      %v381 = vpop.f32.mrb[0].mxu0
      %382 = vmatprep.mubr.f32.mxu0 0.0
      %383 = vmatmul.mubr.f32.gmra.mrb[0].mxu0 %v265
      %v384 = vpop.f32.mrb[0].mxu0
      %v385 = vadd.f32 0.0, %v384
      %v386 = vpop.f32.mrb[0].mxu0
      %387 = vmatprep.mubr.f32.mxu0 0.0
      %388 = vmatmul.mubr.f32.gmra.mrb[0].mxu0 %v268
      %v389 = vpop.f32.mrb[0].mxu0
      %v390 = vadd.f32 0.0, %v389
      %v391 = vpop.f32.mrb[0].mxu0
      %392 = vmatprep.mubr.f32.mxu0 0.0
      %393 = vmatmul.mubr.f32.gmra.mrb[0].mxu0 %v271
      %v394 = vpop.f32.mrb[0].mxu0
      %v395 = vadd.f32 0.0, %v394
      %v396 = vpop.f32.mrb[0].mxu0
      %397 = vmatprep.mubr.f32.mxu0 0.0
      %398 = vmatmul.mubr.f32.gmra.mrb[0].mxu0 %v274
      %v399 = vpop.f32.mrb[0].mxu0
      %v400 = vadd.f32 0.0, %v399
      %v401 = vpop.f32.mrb[0].mxu0
      %402 = vmatprep.mubr.f32.mxu0 0.0
      %403 = vmatmul.mubr.f32.gmra.mrb[0].mxu0 %v277
      %v404 = vpop.f32.mrb[0].mxu0
      %v405 = vadd.f32 0.0, %v404
      %v406 = vpop.f32.mrb[0].mxu0
      %407 = vmatprep.mubr.f32.mxu0 0.0
      %408 = vmatmul.mubr.f32.gmra.mrb[0].mxu0 %v280
      %v409 = vpop.f32.mrb[0].mxu0
      %v410 = vadd.f32 0.0, %v409
      %v411 = vpop.f32.mrb[0].mxu0
      %412 = vmatprep.mubr.f32.mxu0 0.0
      %413 = vmatmul.mubr.f32.gmra.mrb[0].mxu0 %v283
      %v414 = vpop.f32.mrb[0].mxu0
      %v415 = vadd.f32 0.0, %v414
      %v416 = vpop.f32.mrb[0].mxu0
      %417 = vmatprep.mubr.f32.mxu0 0.0
      %418 = vmatmul.mubr.f32.gmra.mrb[0].mxu0 %v286
      %v419 = vpop.f32.mrb[0].mxu0
      %v420 = vadd.f32 0.0, %v419
      %v421 = vpop.f32.mrb[0].mxu0
      %422 = vmatprep.mubr.f32.mxu0 0.0
      %423 = vmatmul.mubr.f32.gmra.mrb[0].mxu0 %v289
      %v424 = vpop.f32.mrb[0].mxu0
      %v425 = vadd.f32 0.0, %v424
      %v426 = vpop.f32.mrb[0].mxu0
      %427 = vmatprep.mubr.f32.mxu0 0.0
      %428 = vmatmul.mubr.f32.gmra.mrb[0].mxu0 %v292
      %v429 = vpop.f32.mrb[0].mxu0
      %v430 = vadd.f32 0.0, %v429
      %v431 = vpop.f32.mrb[0].mxu0
      %432 = vmatprep.mubr.f32.mxu0 0.0
      %433 = vmatmul.mubr.f32.gmra.mrb[0].mxu0 %v295
      %v434 = vpop.f32.mrb[0].mxu0
      %v435 = vadd.f32 0.0, %v434
      %v436 = vpop.f32.mrb[0].mxu0
      %437 = vmatprep.mubr.f32.mxu0 0.0
      %438 = vmatmul.mubr.f32.gmra.mrb[0].mxu0 %v298
      %v439 = vpop.f32.mrb[0].mxu0
      %v440 = vadd.f32 0.0, %v439
      %v441 = vpop.f32.mrb[0].mxu0
      %442 = vmatprep.mubr.f32.mxu0 0.0
      %443 = vmatmul.mubr.f32.gmra.mrb[0].mxu0 %v301
      %v444 = vpop.f32.mrb[0].mxu0
      %v445 = vadd.f32 0.0, %v444
      %v446 = vpop.f32.mrb[0].mxu0
      %447 = vdwg.mxu0
      %v448 = vmul.f32 %v253, %v253
      %v449 = vrot.slane %v448, 4
      %v450 = vadd.f32 %v448, %v449
      %v451 = vrot.slane %v450, 2
      %v452 = vadd.f32 %v450, %v451
      %v453 = vrot.slane %v452, 1
      %v454 = vadd.f32 %v452, %v453
      %v455 = vmul.f32 %v370, 2.0
      %v456 = vmul.f32 %v375, 2.0
      %v457 = vmul.f32 %v380, 2.0
      %v458 = vmul.f32 %v385, 2.0
      %v459 = vmul.f32 %v390, 2.0
      %v460 = vmul.f32 %v395, 2.0
      %v461 = vmul.f32 %v400, 2.0
      %v462 = vmul.f32 %v405, 2.0
      %v463 = vmul.f32 %v410, 2.0
      %v464 = vmul.f32 %v415, 2.0
      %v465 = vmul.f32 %v420, 2.0
      %v466 = vmul.f32 %v425, 2.0
      %v467 = vmul.f32 %v430, 2.0
      %v468 = vmul.f32 %v435, 2.0
      %v469 = vmul.f32 %v440, 2.0
      %v470 = vmul.f32 %v445, 2.0
      %v471 = vld [vmem:[%s229] sm:$0xff]
      %v472 = vld [vmem:[%s229 + $0x8] sm:$0xff]
      %v473 = vld [vmem:[%s229 + $0x10] sm:$0xff]
      %v474 = vld [vmem:[%s229 + $0x18] sm:$0xff]
      %v475 = vld [vmem:[%s229 + $0x20] sm:$0xff]
      %v476 = vld [vmem:[%s229 + $0x28] sm:$0xff]
      %v477 = vld [vmem:[%s229 + $0x30] sm:$0xff]
      %v478 = vld [vmem:[%s229 + $0x38] sm:$0xff]
      %v479 = vld [vmem:[%s229 + $0x40] sm:$0xff]
      %v480 = vld [vmem:[%s229 + $0x48] sm:$0xff]
      %v481 = vld [vmem:[%s229 + $0x50] sm:$0xff]
      %v482 = vld [vmem:[%s229 + $0x58] sm:$0xff]
      %v483 = vld [vmem:[%s229 + $0x60] sm:$0xff]
      %v484 = vld [vmem:[%s229 + $0x68] sm:$0xff]
      %v485 = vld [vmem:[%s229 + $0x70] sm:$0xff]
      %v486 = vld [vmem:[%s229 + $0x78] sm:$0xff]
      %488 = vset.pattern.permute.xlu0 0
      %489 = vperm.xlu0 %488, %v471
      %v490 = vpop.permute.xlu0 %489
      %493 = vset.pattern.permute.xlu0 0
      %494 = vperm.xlu0 %493, %v472
      %v495 = vpop.permute.xlu0 %494
      %498 = vset.pattern.permute.xlu0 0
      %499 = vperm.xlu0 %498, %v473
      %v500 = vpop.permute.xlu0 %499
      %503 = vset.pattern.permute.xlu0 0
      %504 = vperm.xlu0 %503, %v474
      %v505 = vpop.permute.xlu0 %504
      %508 = vset.pattern.permute.xlu0 0
      %509 = vperm.xlu0 %508, %v475
      %v510 = vpop.permute.xlu0 %509
      %513 = vset.pattern.permute.xlu0 0
      %514 = vperm.xlu0 %513, %v476
      %v515 = vpop.permute.xlu0 %514
      %518 = vset.pattern.permute.xlu0 0
      %519 = vperm.xlu0 %518, %v477
      %v520 = vpop.permute.xlu0 %519
      %523 = vset.pattern.permute.xlu0 0
      %524 = vperm.xlu0 %523, %v478
      %v525 = vpop.permute.xlu0 %524
      %528 = vset.pattern.permute.xlu0 0
      %529 = vperm.xlu0 %528, %v479
      %v530 = vpop.permute.xlu0 %529
      %533 = vset.pattern.permute.xlu0 0
      %534 = vperm.xlu0 %533, %v480
      %v535 = vpop.permute.xlu0 %534
      %538 = vset.pattern.permute.xlu0 0
      %539 = vperm.xlu0 %538, %v481
      %v540 = vpop.permute.xlu0 %539
      %543 = vset.pattern.permute.xlu0 0
      %544 = vperm.xlu0 %543, %v482
      %v545 = vpop.permute.xlu0 %544
      %548 = vset.pattern.permute.xlu0 0
      %549 = vperm.xlu0 %548, %v483
      %v550 = vpop.permute.xlu0 %549
      %553 = vset.pattern.permute.xlu0 0
      %554 = vperm.xlu0 %553, %v484
      %v555 = vpop.permute.xlu0 %554
      %558 = vset.pattern.permute.xlu0 0
      %559 = vperm.xlu0 %558, %v485
      %v560 = vpop.permute.xlu0 %559
      %563 = vset.pattern.permute.xlu0 0
      %564 = vperm.xlu0 %563, %v486
      %v565 = vpop.permute.xlu0 %564
      %v567 = vsub.f32 %v455, %v490
      %v568 = vsub.f32 %v456, %v495
      %v569 = vsub.f32 %v457, %v500
      %v570 = vsub.f32 %v458, %v505
      %v571 = vsub.f32 %v459, %v510
      %v572 = vsub.f32 %v460, %v515
      %v573 = vsub.f32 %v461, %v520
      %v574 = vsub.f32 %v462, %v525
      %v575 = vsub.f32 %v463, %v530
      %v576 = vsub.f32 %v464, %v535
      %v577 = vsub.f32 %v465, %v540
      %v578 = vsub.f32 %v466, %v545
      %v579 = vsub.f32 %v467, %v550
      %v580 = vsub.f32 %v468, %v555
      %v581 = vsub.f32 %v469, %v560
      %v582 = vsub.f32 %v470, %v565
      %v583 = vsub.f32 %v567, %v454
      %v584 = vsub.f32 %v568, %v454
      %v585 = vsub.f32 %v569, %v454
      %v586 = vsub.f32 %v570, %v454
      %v587 = vsub.f32 %v571, %v454
      %v588 = vsub.f32 %v572, %v454
      %v589 = vsub.f32 %v573, %v454
      %v590 = vsub.f32 %v574, %v454
      %v591 = vsub.f32 %v575, %v454
      %v592 = vsub.f32 %v576, %v454
      %v593 = vsub.f32 %v577, %v454
      %v594 = vsub.f32 %v578, %v454
      %v595 = vsub.f32 %v579, %v454
      %v596 = vsub.f32 %v580, %v454
      %v597 = vsub.f32 %v581, %v454
      %v598 = vsub.f32 %v582, %v454
      %v599 = vlaneseq
      %v600 = vshrl.u32 %v599, 7
      %v601 = vadd.s32 %v600, 8
      %v602 = vadd.s32 %v600, 16
      %v603 = vadd.s32 %v600, 24
      %v604 = vadd.s32 %v600, 32
      %v605 = vadd.s32 %v600, 40
      %v606 = vadd.s32 %v600, 48
      %v607 = vadd.s32 %v600, 56
      %v608 = vadd.s32 %v600, 64
      %v609 = vadd.s32 %v600, 72
      %v610 = vadd.s32 %v600, 80
      %v611 = vadd.s32 %v600, 88
      %v612 = vadd.s32 %v600, 96
      %v613 = vadd.s32 %v600, 104
      %v614 = vadd.s32 %v600, 112
      %v615 = vadd.s32 %v600, 120
      %v616 = vcvt.s32.f32 %v600
      %v617 = vcvt.s32.f32 %v601
      %v618 = vcvt.s32.f32 %v602
      %v619 = vcvt.s32.f32 %v603
      %v620 = vcvt.s32.f32 %v604
      %v621 = vcvt.s32.f32 %v605
      %v622 = vcvt.s32.f32 %v606
      %v623 = vcvt.s32.f32 %v607
      %v624 = vcvt.s32.f32 %v608
      %v625 = vcvt.s32.f32 %v609
      %v626 = vcvt.s32.f32 %v610
      %v627 = vcvt.s32.f32 %v611
      %v628 = vcvt.s32.f32 %v612
      %v629 = vcvt.s32.f32 %v613
      %v630 = vcvt.s32.f32 %v614
      %v631 = vcvt.s32.f32 %v615
      %v632 = vmax.f32 %v583, %v587
      %v633 = vmax.f32 %v584, %v588
      %v634 = vmax.f32 %v585, %v589
      %v635 = vmax.f32 %v586, %v590
      %v636 = vmax.f32 %v632, %v591
      %v637 = vmax.f32 %v633, %v592
      %v638 = vmax.f32 %v634, %v593
      %v639 = vmax.f32 %v635, %v594
      %v640 = vmax.f32 %v636, %v595
      %v641 = vmax.f32 %v637, %v596
      %v642 = vmax.f32 %v638, %v597
      %v643 = vmax.f32 %v639, %v598
      %v644 = vmax.f32 %v640, %v641
      %v645 = vmax.f32 %v642, %v643
      %v646 = vmax.f32 %v644, %v645
      %v647 = vrot.slane %v646, 4
      %v648 = vmax.f32 %v646, %v647
      %v649 = vrot.slane %v648, 2
      %v650 = vmax.f32 %v648, %v649
      %v651 = vrot.slane %v650, 1
      %v652 = vmax.f32 %v650, %v651
      %vm653 = vcmp.eq.f32.partialorder %v583, %v652
      %vm654 = vcmp.eq.f32.partialorder %v584, %v652
      %vm655 = vcmp.eq.f32.partialorder %v585, %v652
      %vm656 = vcmp.eq.f32.partialorder %v586, %v652
      %vm657 = vcmp.eq.f32.partialorder %v587, %v652
      %vm658 = vcmp.eq.f32.partialorder %v588, %v652
      %vm659 = vcmp.eq.f32.partialorder %v589, %v652
      %vm660 = vcmp.eq.f32.partialorder %v590, %v652
      %vm661 = vcmp.eq.f32.partialorder %v591, %v652
      %vm662 = vcmp.eq.f32.partialorder %v592, %v652
      %vm663 = vcmp.eq.f32.partialorder %v593, %v652
      %vm664 = vcmp.eq.f32.partialorder %v594, %v652
      %vm665 = vcmp.eq.f32.partialorder %v595, %v652
      %vm666 = vcmp.eq.f32.partialorder %v596, %v652
      %vm667 = vcmp.eq.f32.partialorder %v597, %v652
      %vm668 = vcmp.eq.f32.partialorder %v598, %v652
      %v669 = vsel %vm653, %v616, 128.0
      %v670 = vsel %vm654, %v617, 128.0
      %v671 = vsel %vm655, %v618, 128.0
      %v672 = vsel %vm656, %v619, 128.0
      %v673 = vsel %vm657, %v620, 128.0
      %v674 = vsel %vm658, %v621, 128.0
      %v675 = vsel %vm659, %v622, 128.0
      %v676 = vsel %vm660, %v623, 128.0
      %v677 = vsel %vm661, %v624, 128.0
      %v678 = vsel %vm662, %v625, 128.0
      %v679 = vsel %vm663, %v626, 128.0
      %v680 = vsel %vm664, %v627, 128.0
      %v681 = vsel %vm665, %v628, 128.0
      %v682 = vsel %vm666, %v629, 128.0
      %v683 = vsel %vm667, %v630, 128.0
      %v684 = vsel %vm668, %v631, 128.0
      %v685 = vmin.f32 %v669, %v673
      %v686 = vmin.f32 %v670, %v674
      %v687 = vmin.f32 %v671, %v675
      %v688 = vmin.f32 %v672, %v676
      %v689 = vmin.f32 %v685, %v677
      %v690 = vmin.f32 %v686, %v678
      %v691 = vmin.f32 %v687, %v679
      %v692 = vmin.f32 %v688, %v680
      %v693 = vmin.f32 %v689, %v681
      %v694 = vmin.f32 %v690, %v682
      %v695 = vmin.f32 %v691, %v683
      %v696 = vmin.f32 %v692, %v684
      %v697 = vmin.f32 %v693, %v694
      %v698 = vmin.f32 %v695, %v696
      %v699 = vmin.f32 %v697, %v698
      %v700 = vrot.slane %v699, 4
      %v701 = vmin.f32 %v699, %v700
      %v702 = vrot.slane %v701, 2
      %v703 = vmin.f32 %v701, %v702
      %v704 = vrot.slane %v703, 1
      %v705 = vmin.f32 %v703, %v704
      %v706 = vcvt.f32.s32.to.zero.pseudo %v705
      %707 = vst [vmem:[%s236] sm:$0x1] %v706
      %vm708 = vcmp.eq.f32.partialorder %v616, %v705
      %vm709 = vcmp.eq.f32.partialorder %v617, %v705
      %vm710 = vcmp.eq.f32.partialorder %v618, %v705
      %vm711 = vcmp.eq.f32.partialorder %v619, %v705
      %vm712 = vcmp.eq.f32.partialorder %v620, %v705
      %vm713 = vcmp.eq.f32.partialorder %v621, %v705
      %vm714 = vcmp.eq.f32.partialorder %v622, %v705
      %vm715 = vcmp.eq.f32.partialorder %v623, %v705
      %vm716 = vcmp.eq.f32.partialorder %v624, %v705
      %vm717 = vcmp.eq.f32.partialorder %v625, %v705
      %vm718 = vcmp.eq.f32.partialorder %v626, %v705
      %vm719 = vcmp.eq.f32.partialorder %v627, %v705
      %vm720 = vcmp.eq.f32.partialorder %v628, %v705
      %vm721 = vcmp.eq.f32.partialorder %v629, %v705
      %vm722 = vcmp.eq.f32.partialorder %v630, %v705
      %vm723 = vcmp.eq.f32.partialorder %v631, %v705
      %v724 = vsel %vm708, -inf, %v583
      %v725 = vsel %vm709, -inf, %v584
      %v726 = vsel %vm710, -inf, %v585
      %v727 = vsel %vm711, -inf, %v586
      %v728 = vsel %vm712, -inf, %v587
      %v729 = vsel %vm713, -inf, %v588
      %v730 = vsel %vm714, -inf, %v589
      %v731 = vsel %vm715, -inf, %v590
      %v732 = vsel %vm716, -inf, %v591
      %v733 = vsel %vm717, -inf, %v592
      %v734 = vsel %vm718, -inf, %v593
      %v735 = vsel %vm719, -inf, %v594
      %v736 = vsel %vm720, -inf, %v595
      %v737 = vsel %vm721, -inf, %v596
      %v738 = vsel %vm722, -inf, %v597
      %v739 = vsel %vm723, -inf, %v598
      %v740 = vmax.f32 %v724, %v728
      %v741 = vmax.f32 %v725, %v729
      %v742 = vmax.f32 %v726, %v730
      %v743 = vmax.f32 %v727, %v731
      %v744 = vmax.f32 %v740, %v732
      %v745 = vmax.f32 %v741, %v733
      %v746 = vmax.f32 %v742, %v734
      %v747 = vmax.f32 %v743, %v735
      %v748 = vmax.f32 %v744, %v736
      %v749 = vmax.f32 %v745, %v737
      %v750 = vmax.f32 %v746, %v738
      %v751 = vmax.f32 %v747, %v739
      %v752 = vmax.f32 %v748, %v749
      %v753 = vmax.f32 %v750, %v751
      %v754 = vmax.f32 %v752, %v753
      %v755 = vrot.slane %v754, 4
      %v756 = vmax.f32 %v754, %v755
      %v757 = vrot.slane %v756, 2
      %v758 = vmax.f32 %v756, %v757
      %v759 = vrot.slane %v758, 1
      %v760 = vmax.f32 %v758, %v759
      %vm761 = vcmp.eq.f32.partialorder %v724, %v760
      %vm762 = vcmp.eq.f32.partialorder %v725, %v760
      %vm763 = vcmp.eq.f32.partialorder %v726, %v760
      %vm764 = vcmp.eq.f32.partialorder %v727, %v760
      %vm765 = vcmp.eq.f32.partialorder %v728, %v760
      %vm766 = vcmp.eq.f32.partialorder %v729, %v760
      %vm767 = vcmp.eq.f32.partialorder %v730, %v760
      %vm768 = vcmp.eq.f32.partialorder %v731, %v760
      %vm769 = vcmp.eq.f32.partialorder %v732, %v760
      %vm770 = vcmp.eq.f32.partialorder %v733, %v760
      %vm771 = vcmp.eq.f32.partialorder %v734, %v760
      %vm772 = vcmp.eq.f32.partialorder %v735, %v760
      %vm773 = vcmp.eq.f32.partialorder %v736, %v760
      %vm774 = vcmp.eq.f32.partialorder %v737, %v760
      %vm775 = vcmp.eq.f32.partialorder %v738, %v760
      %vm776 = vcmp.eq.f32.partialorder %v739, %v760
      %v777 = vsel %vm761, %v616, 128.0
      %v778 = vsel %vm762, %v617, 128.0
      %v779 = vsel %vm763, %v618, 128.0
      %v780 = vsel %vm764, %v619, 128.0
      %v781 = vsel %vm765, %v620, 128.0
      %v782 = vsel %vm766, %v621, 128.0
      %v783 = vsel %vm767, %v622, 128.0
      %v784 = vsel %vm768, %v623, 128.0
      %v785 = vsel %vm769, %v624, 128.0
      %v786 = vsel %vm770, %v625, 128.0
      %v787 = vsel %vm771, %v626, 128.0
      %v788 = vsel %vm772, %v627, 128.0
      %v789 = vsel %vm773, %v628, 128.0
      %v790 = vsel %vm774, %v629, 128.0
      %v791 = vsel %vm775, %v630, 128.0
      %v792 = vsel %vm776, %v631, 128.0
      %v793 = vmin.f32 %v777, %v781
      %v794 = vmin.f32 %v778, %v782
      %v795 = vmin.f32 %v779, %v783
      %v796 = vmin.f32 %v780, %v784
      %v797 = vmin.f32 %v793, %v785
      %v798 = vmin.f32 %v794, %v786
      %v799 = vmin.f32 %v795, %v787
      %v800 = vmin.f32 %v796, %v788
      %v801 = vmin.f32 %v797, %v789
      %v802 = vmin.f32 %v798, %v790
      %v803 = vmin.f32 %v799, %v791
      %v804 = vmin.f32 %v800, %v792
      %v805 = vmin.f32 %v801, %v802
      %v806 = vmin.f32 %v803, %v804
      %v807 = vmin.f32 %v805, %v806
      %v808 = vrot.slane %v807, 4
      %v809 = vmin.f32 %v807, %v808
      %v810 = vrot.slane %v809, 2
      %v811 = vmin.f32 %v809, %v810
      %v812 = vrot.slane %v811, 1
      %v813 = vmin.f32 %v811, %v812
      %v814 = vcvt.f32.s32.to.zero.pseudo %v813
      %s815 = scalar_lea.vmem %s236, 1
      %816 = vst [vmem:[%s815] sm:$0x1] %v814
      %vm817 = vcmp.eq.f32.partialorder %v616, %v813
      %vm818 = vcmp.eq.f32.partialorder %v617, %v813
      %vm819 = vcmp.eq.f32.partialorder %v618, %v813
      %vm820 = vcmp.eq.f32.partialorder %v619, %v813
      %vm821 = vcmp.eq.f32.partialorder %v620, %v813
      %vm822 = vcmp.eq.f32.partialorder %v621, %v813
      %vm823 = vcmp.eq.f32.partialorder %v622, %v813
      %vm824 = vcmp.eq.f32.partialorder %v623, %v813
      %vm825 = vcmp.eq.f32.partialorder %v624, %v813
      %vm826 = vcmp.eq.f32.partialorder %v625, %v813
      %vm827 = vcmp.eq.f32.partialorder %v626, %v813
      %vm828 = vcmp.eq.f32.partialorder %v627, %v813
      %vm829 = vcmp.eq.f32.partialorder %v628, %v813
      %vm830 = vcmp.eq.f32.partialorder %v629, %v813
      %vm831 = vcmp.eq.f32.partialorder %v630, %v813
      %vm832 = vcmp.eq.f32.partialorder %v631, %v813
      %v833 = vsel %vm817, -inf, %v724
      %v834 = vsel %vm818, -inf, %v725
      %v835 = vsel %vm819, -inf, %v726
      %v836 = vsel %vm820, -inf, %v727
      %v837 = vsel %vm821, -inf, %v728
      %v838 = vsel %vm822, -inf, %v729
      %v839 = vsel %vm823, -inf, %v730
      %v840 = vsel %vm824, -inf, %v731
      %v841 = vsel %vm825, -inf, %v732
      %v842 = vsel %vm826, -inf, %v733
      %v843 = vsel %vm827, -inf, %v734
      %v844 = vsel %vm828, -inf, %v735
      %v845 = vsel %vm829, -inf, %v736
      %v846 = vsel %vm830, -inf, %v737
      %v847 = vsel %vm831, -inf, %v738
      %v848 = vsel %vm832, -inf, %v739
      %v849 = vmax.f32 %v833, %v837
      %v850 = vmax.f32 %v834, %v838
      %v851 = vmax.f32 %v835, %v839
      %v852 = vmax.f32 %v836, %v840
      %v853 = vmax.f32 %v849, %v841
      %v854 = vmax.f32 %v850, %v842
      %v855 = vmax.f32 %v851, %v843
      %v856 = vmax.f32 %v852, %v844
      %v857 = vmax.f32 %v853, %v845
      %v858 = vmax.f32 %v854, %v846
      %v859 = vmax.f32 %v855, %v847
      %v860 = vmax.f32 %v856, %v848
      %v861 = vmax.f32 %v857, %v858
      %v862 = vmax.f32 %v859, %v860
      %v863 = vmax.f32 %v861, %v862
      %v864 = vrot.slane %v863, 4
      %v865 = vmax.f32 %v863, %v864
      %v866 = vrot.slane %v865, 2
      %v867 = vmax.f32 %v865, %v866
      %v868 = vrot.slane %v867, 1
      %v869 = vmax.f32 %v867, %v868
      %vm870 = vcmp.eq.f32.partialorder %v833, %v869
      %vm871 = vcmp.eq.f32.partialorder %v834, %v869
      %vm872 = vcmp.eq.f32.partialorder %v835, %v869
      %vm873 = vcmp.eq.f32.partialorder %v836, %v869
      %vm874 = vcmp.eq.f32.partialorder %v837, %v869
      %vm875 = vcmp.eq.f32.partialorder %v838, %v869
      %vm876 = vcmp.eq.f32.partialorder %v839, %v869
      %vm877 = vcmp.eq.f32.partialorder %v840, %v869
      %vm878 = vcmp.eq.f32.partialorder %v841, %v869
      %vm879 = vcmp.eq.f32.partialorder %v842, %v869
      %vm880 = vcmp.eq.f32.partialorder %v843, %v869
      %vm881 = vcmp.eq.f32.partialorder %v844, %v869
      %vm882 = vcmp.eq.f32.partialorder %v845, %v869
      %vm883 = vcmp.eq.f32.partialorder %v846, %v869
      %vm884 = vcmp.eq.f32.partialorder %v847, %v869
      %vm885 = vcmp.eq.f32.partialorder %v848, %v869
      %v886 = vsel %vm870, %v616, 128.0
      %v887 = vsel %vm871, %v617, 128.0
      %v888 = vsel %vm872, %v618, 128.0
      %v889 = vsel %vm873, %v619, 128.0
      %v890 = vsel %vm874, %v620, 128.0
      %v891 = vsel %vm875, %v621, 128.0
      %v892 = vsel %vm876, %v622, 128.0
      %v893 = vsel %vm877, %v623, 128.0
      %v894 = vsel %vm878, %v624, 128.0
      %v895 = vsel %vm879, %v625, 128.0
      %v896 = vsel %vm880, %v626, 128.0
      %v897 = vsel %vm881, %v627, 128.0
      %v898 = vsel %vm882, %v628, 128.0
      %v899 = vsel %vm883, %v629, 128.0
      %v900 = vsel %vm884, %v630, 128.0
      %v901 = vsel %vm885, %v631, 128.0
      %v902 = vmin.f32 %v886, %v890
      %v903 = vmin.f32 %v887, %v891
      %v904 = vmin.f32 %v888, %v892
      %v905 = vmin.f32 %v889, %v893
      %v906 = vmin.f32 %v902, %v894
      %v907 = vmin.f32 %v903, %v895
      %v908 = vmin.f32 %v904, %v896
      %v909 = vmin.f32 %v905, %v897
      %v910 = vmin.f32 %v906, %v898
      %v911 = vmin.f32 %v907, %v899
      %v912 = vmin.f32 %v908, %v900
      %v913 = vmin.f32 %v909, %v901
      %v914 = vmin.f32 %v910, %v911
      %v915 = vmin.f32 %v912, %v913
      %v916 = vmin.f32 %v914, %v915
      %v917 = vrot.slane %v916, 4
      %v918 = vmin.f32 %v916, %v917
      %v919 = vrot.slane %v918, 2
      %v920 = vmin.f32 %v918, %v919
      %v921 = vrot.slane %v920, 1
      %v922 = vmin.f32 %v920, %v921
      %v923 = vcvt.f32.s32.to.zero.pseudo %v922
      %s924 = scalar_lea.vmem %s236, 2
      %925 = vst [vmem:[%s924] sm:$0x1] %v923
      %vm926 = vcmp.eq.f32.partialorder %v616, %v922
      %vm927 = vcmp.eq.f32.partialorder %v617, %v922
      %vm928 = vcmp.eq.f32.partialorder %v618, %v922
      %vm929 = vcmp.eq.f32.partialorder %v619, %v922
      %vm930 = vcmp.eq.f32.partialorder %v620, %v922
      %vm931 = vcmp.eq.f32.partialorder %v621, %v922
      %vm932 = vcmp.eq.f32.partialorder %v622, %v922
      %vm933 = vcmp.eq.f32.partialorder %v623, %v922
      %vm934 = vcmp.eq.f32.partialorder %v624, %v922
      %vm935 = vcmp.eq.f32.partialorder %v625, %v922
      %vm936 = vcmp.eq.f32.partialorder %v626, %v922
      %vm937 = vcmp.eq.f32.partialorder %v627, %v922
      %vm938 = vcmp.eq.f32.partialorder %v628, %v922
      %vm939 = vcmp.eq.f32.partialorder %v629, %v922
      %vm940 = vcmp.eq.f32.partialorder %v630, %v922
      %vm941 = vcmp.eq.f32.partialorder %v631, %v922
      %v942 = vsel %vm926, -inf, %v833
      %v943 = vsel %vm927, -inf, %v834
      %v944 = vsel %vm928, -inf, %v835
      %v945 = vsel %vm929, -inf, %v836
      %v946 = vsel %vm930, -inf, %v837
      %v947 = vsel %vm931, -inf, %v838
      %v948 = vsel %vm932, -inf, %v839
      %v949 = vsel %vm933, -inf, %v840
      %v950 = vsel %vm934, -inf, %v841
      %v951 = vsel %vm935, -inf, %v842
      %v952 = vsel %vm936, -inf, %v843
      %v953 = vsel %vm937, -inf, %v844
      %v954 = vsel %vm938, -inf, %v845
      %v955 = vsel %vm939, -inf, %v846
      %v956 = vsel %vm940, -inf, %v847
      %v957 = vsel %vm941, -inf, %v848
      %v958 = vmax.f32 %v942, %v946
      %v959 = vmax.f32 %v943, %v947
      %v960 = vmax.f32 %v944, %v948
      %v961 = vmax.f32 %v945, %v949
      %v962 = vmax.f32 %v958, %v950
      %v963 = vmax.f32 %v959, %v951
      %v964 = vmax.f32 %v960, %v952
      %v965 = vmax.f32 %v961, %v953
      %v966 = vmax.f32 %v962, %v954
      %v967 = vmax.f32 %v963, %v955
      %v968 = vmax.f32 %v964, %v956
      %v969 = vmax.f32 %v965, %v957
      %v970 = vmax.f32 %v966, %v967
      %v971 = vmax.f32 %v968, %v969
      %v972 = vmax.f32 %v970, %v971
      %v973 = vrot.slane %v972, 4
      %v974 = vmax.f32 %v972, %v973
      %v975 = vrot.slane %v974, 2
      %v976 = vmax.f32 %v974, %v975
      %v977 = vrot.slane %v976, 1
      %v978 = vmax.f32 %v976, %v977
      %vm979 = vcmp.eq.f32.partialorder %v942, %v978
      %vm980 = vcmp.eq.f32.partialorder %v943, %v978
      %vm981 = vcmp.eq.f32.partialorder %v944, %v978
      %vm982 = vcmp.eq.f32.partialorder %v945, %v978
      %vm983 = vcmp.eq.f32.partialorder %v946, %v978
      %vm984 = vcmp.eq.f32.partialorder %v947, %v978
      %vm985 = vcmp.eq.f32.partialorder %v948, %v978
      %vm986 = vcmp.eq.f32.partialorder %v949, %v978
      %vm987 = vcmp.eq.f32.partialorder %v950, %v978
      %vm988 = vcmp.eq.f32.partialorder %v951, %v978
      %vm989 = vcmp.eq.f32.partialorder %v952, %v978
      %vm990 = vcmp.eq.f32.partialorder %v953, %v978
      %vm991 = vcmp.eq.f32.partialorder %v954, %v978
      %vm992 = vcmp.eq.f32.partialorder %v955, %v978
      %vm993 = vcmp.eq.f32.partialorder %v956, %v978
      %vm994 = vcmp.eq.f32.partialorder %v957, %v978
      %v995 = vsel %vm979, %v616, 128.0
      %v996 = vsel %vm980, %v617, 128.0
      %v997 = vsel %vm981, %v618, 128.0
      %v998 = vsel %vm982, %v619, 128.0
      %v999 = vsel %vm983, %v620, 128.0
      %v1000 = vsel %vm984, %v621, 128.0
      %v1001 = vsel %vm985, %v622, 128.0
      %v1002 = vsel %vm986, %v623, 128.0
      %v1003 = vsel %vm987, %v624, 128.0
      %v1004 = vsel %vm988, %v625, 128.0
      %v1005 = vsel %vm989, %v626, 128.0
      %v1006 = vsel %vm990, %v627, 128.0
      %v1007 = vsel %vm991, %v628, 128.0
      %v1008 = vsel %vm992, %v629, 128.0
      %v1009 = vsel %vm993, %v630, 128.0
      %v1010 = vsel %vm994, %v631, 128.0
      %v1011 = vmin.f32 %v995, %v999
      %v1012 = vmin.f32 %v996, %v1000
      %v1013 = vmin.f32 %v997, %v1001
      %v1014 = vmin.f32 %v998, %v1002
      %v1015 = vmin.f32 %v1011, %v1003
      %v1016 = vmin.f32 %v1012, %v1004
      %v1017 = vmin.f32 %v1013, %v1005
      %v1018 = vmin.f32 %v1014, %v1006
      %v1019 = vmin.f32 %v1015, %v1007
      %v1020 = vmin.f32 %v1016, %v1008
      %v1021 = vmin.f32 %v1017, %v1009
      %v1022 = vmin.f32 %v1018, %v1010
      %v1023 = vmin.f32 %v1019, %v1020
      %v1024 = vmin.f32 %v1021, %v1022
      %v1025 = vmin.f32 %v1023, %v1024
      %v1026 = vrot.slane %v1025, 4
      %v1027 = vmin.f32 %v1025, %v1026
      %v1028 = vrot.slane %v1027, 2
      %v1029 = vmin.f32 %v1027, %v1028
      %v1030 = vrot.slane %v1029, 1
      %v1031 = vmin.f32 %v1029, %v1030
      %v1032 = vcvt.f32.s32.to.zero.pseudo %v1031
      %s1033 = scalar_lea.vmem %s236, 3
      %1034 = vst [vmem:[%s1033] sm:$0x1] %v1032
      %vm1035 = vcmp.eq.f32.partialorder %v616, %v1031
      %vm1036 = vcmp.eq.f32.partialorder %v617, %v1031
      %vm1037 = vcmp.eq.f32.partialorder %v618, %v1031
      %vm1038 = vcmp.eq.f32.partialorder %v619, %v1031
      %vm1039 = vcmp.eq.f32.partialorder %v620, %v1031
      %vm1040 = vcmp.eq.f32.partialorder %v621, %v1031
      %vm1041 = vcmp.eq.f32.partialorder %v622, %v1031
      %vm1042 = vcmp.eq.f32.partialorder %v623, %v1031
      %vm1043 = vcmp.eq.f32.partialorder %v624, %v1031
      %vm1044 = vcmp.eq.f32.partialorder %v625, %v1031
      %vm1045 = vcmp.eq.f32.partialorder %v626, %v1031
      %vm1046 = vcmp.eq.f32.partialorder %v627, %v1031
      %vm1047 = vcmp.eq.f32.partialorder %v628, %v1031
      %vm1048 = vcmp.eq.f32.partialorder %v629, %v1031
      %vm1049 = vcmp.eq.f32.partialorder %v630, %v1031
      %vm1050 = vcmp.eq.f32.partialorder %v631, %v1031
      %v1051 = vsel %vm1035, -inf, %v942
      %v1052 = vsel %vm1036, -inf, %v943
      %v1053 = vsel %vm1037, -inf, %v944
      %v1054 = vsel %vm1038, -inf, %v945
      %v1055 = vsel %vm1039, -inf, %v946
      %v1056 = vsel %vm1040, -inf, %v947
      %v1057 = vsel %vm1041, -inf, %v948
      %v1058 = vsel %vm1042, -inf, %v949
      %v1059 = vsel %vm1043, -inf, %v950
      %v1060 = vsel %vm1044, -inf, %v951
      %v1061 = vsel %vm1045, -inf, %v952
      %v1062 = vsel %vm1046, -inf, %v953
      %v1063 = vsel %vm1047, -inf, %v954
      %v1064 = vsel %vm1048, -inf, %v955
      %v1065 = vsel %vm1049, -inf, %v956
      %v1066 = vsel %vm1050, -inf, %v957
      %v1067 = vmax.f32 %v1051, %v1055
      %v1068 = vmax.f32 %v1052, %v1056
      %v1069 = vmax.f32 %v1053, %v1057
      %v1070 = vmax.f32 %v1054, %v1058
      %v1071 = vmax.f32 %v1067, %v1059
      %v1072 = vmax.f32 %v1068, %v1060
      %v1073 = vmax.f32 %v1069, %v1061
      %v1074 = vmax.f32 %v1070, %v1062
      %v1075 = vmax.f32 %v1071, %v1063
      %v1076 = vmax.f32 %v1072, %v1064
      %v1077 = vmax.f32 %v1073, %v1065
      %v1078 = vmax.f32 %v1074, %v1066
      %v1079 = vmax.f32 %v1075, %v1076
      %v1080 = vmax.f32 %v1077, %v1078
      %v1081 = vmax.f32 %v1079, %v1080
      %v1082 = vrot.slane %v1081, 4
      %v1083 = vmax.f32 %v1081, %v1082
      %v1084 = vrot.slane %v1083, 2
      %v1085 = vmax.f32 %v1083, %v1084
      %v1086 = vrot.slane %v1085, 1
      %v1087 = vmax.f32 %v1085, %v1086
      %vm1088 = vcmp.eq.f32.partialorder %v1051, %v1087
      %vm1089 = vcmp.eq.f32.partialorder %v1052, %v1087
      %vm1090 = vcmp.eq.f32.partialorder %v1053, %v1087
      %vm1091 = vcmp.eq.f32.partialorder %v1054, %v1087
      %vm1092 = vcmp.eq.f32.partialorder %v1055, %v1087
      %vm1093 = vcmp.eq.f32.partialorder %v1056, %v1087
      %vm1094 = vcmp.eq.f32.partialorder %v1057, %v1087
      %vm1095 = vcmp.eq.f32.partialorder %v1058, %v1087
      %vm1096 = vcmp.eq.f32.partialorder %v1059, %v1087
      %vm1097 = vcmp.eq.f32.partialorder %v1060, %v1087
      %vm1098 = vcmp.eq.f32.partialorder %v1061, %v1087
      %vm1099 = vcmp.eq.f32.partialorder %v1062, %v1087
      %vm1100 = vcmp.eq.f32.partialorder %v1063, %v1087
      %vm1101 = vcmp.eq.f32.partialorder %v1064, %v1087
      %vm1102 = vcmp.eq.f32.partialorder %v1065, %v1087
      %vm1103 = vcmp.eq.f32.partialorder %v1066, %v1087
      %v1104 = vsel %vm1088, %v616, 128.0
      %v1105 = vsel %vm1089, %v617, 128.0
      %v1106 = vsel %vm1090, %v618, 128.0
      %v1107 = vsel %vm1091, %v619, 128.0
      %v1108 = vsel %vm1092, %v620, 128.0
      %v1109 = vsel %vm1093, %v621, 128.0
      %v1110 = vsel %vm1094, %v622, 128.0
      %v1111 = vsel %vm1095, %v623, 128.0
      %v1112 = vsel %vm1096, %v624, 128.0
      %v1113 = vsel %vm1097, %v625, 128.0
      %v1114 = vsel %vm1098, %v626, 128.0
      %v1115 = vsel %vm1099, %v627, 128.0
      %v1116 = vsel %vm1100, %v628, 128.0
      %v1117 = vsel %vm1101, %v629, 128.0
      %v1118 = vsel %vm1102, %v630, 128.0
      %v1119 = vsel %vm1103, %v631, 128.0
      %v1120 = vmin.f32 %v1104, %v1108
      %v1121 = vmin.f32 %v1105, %v1109
      %v1122 = vmin.f32 %v1106, %v1110
      %v1123 = vmin.f32 %v1107, %v1111
      %v1124 = vmin.f32 %v1120, %v1112
      %v1125 = vmin.f32 %v1121, %v1113
      %v1126 = vmin.f32 %v1122, %v1114
      %v1127 = vmin.f32 %v1123, %v1115
      %v1128 = vmin.f32 %v1124, %v1116
      %v1129 = vmin.f32 %v1125, %v1117
      %v1130 = vmin.f32 %v1126, %v1118
      %v1131 = vmin.f32 %v1127, %v1119
      %v1132 = vmin.f32 %v1128, %v1129
      %v1133 = vmin.f32 %v1130, %v1131
      %v1134 = vmin.f32 %v1132, %v1133
      %v1135 = vrot.slane %v1134, 4
      %v1136 = vmin.f32 %v1134, %v1135
      %v1137 = vrot.slane %v1136, 2
      %v1138 = vmin.f32 %v1136, %v1137
      %v1139 = vrot.slane %v1138, 1
      %v1140 = vmin.f32 %v1138, %v1139
      %v1141 = vcvt.f32.s32.to.zero.pseudo %v1140
      %s1142 = scalar_lea.vmem %s236, 4
      %1143 = vst [vmem:[%s1142] sm:$0x1] %v1141
      %vm1144 = vcmp.eq.f32.partialorder %v616, %v1140
      %vm1145 = vcmp.eq.f32.partialorder %v617, %v1140
      %vm1146 = vcmp.eq.f32.partialorder %v618, %v1140
      %vm1147 = vcmp.eq.f32.partialorder %v619, %v1140
      %vm1148 = vcmp.eq.f32.partialorder %v620, %v1140
      %vm1149 = vcmp.eq.f32.partialorder %v621, %v1140
      %vm1150 = vcmp.eq.f32.partialorder %v622, %v1140
      %vm1151 = vcmp.eq.f32.partialorder %v623, %v1140
      %vm1152 = vcmp.eq.f32.partialorder %v624, %v1140
      %vm1153 = vcmp.eq.f32.partialorder %v625, %v1140
      %vm1154 = vcmp.eq.f32.partialorder %v626, %v1140
      %vm1155 = vcmp.eq.f32.partialorder %v627, %v1140
      %vm1156 = vcmp.eq.f32.partialorder %v628, %v1140
      %vm1157 = vcmp.eq.f32.partialorder %v629, %v1140
      %vm1158 = vcmp.eq.f32.partialorder %v630, %v1140
      %vm1159 = vcmp.eq.f32.partialorder %v631, %v1140
      %v1160 = vsel %vm1144, -inf, %v1051
      %v1161 = vsel %vm1145, -inf, %v1052
      %v1162 = vsel %vm1146, -inf, %v1053
      %v1163 = vsel %vm1147, -inf, %v1054
      %v1164 = vsel %vm1148, -inf, %v1055
      %v1165 = vsel %vm1149, -inf, %v1056
      %v1166 = vsel %vm1150, -inf, %v1057
      %v1167 = vsel %vm1151, -inf, %v1058
      %v1168 = vsel %vm1152, -inf, %v1059
      %v1169 = vsel %vm1153, -inf, %v1060
      %v1170 = vsel %vm1154, -inf, %v1061
      %v1171 = vsel %vm1155, -inf, %v1062
      %v1172 = vsel %vm1156, -inf, %v1063
      %v1173 = vsel %vm1157, -inf, %v1064
      %v1174 = vsel %vm1158, -inf, %v1065
      %v1175 = vsel %vm1159, -inf, %v1066
      %v1176 = vmax.f32 %v1160, %v1164
      %v1177 = vmax.f32 %v1161, %v1165
      %v1178 = vmax.f32 %v1162, %v1166
      %v1179 = vmax.f32 %v1163, %v1167
      %v1180 = vmax.f32 %v1176, %v1168
      %v1181 = vmax.f32 %v1177, %v1169
      %v1182 = vmax.f32 %v1178, %v1170
      %v1183 = vmax.f32 %v1179, %v1171
      %v1184 = vmax.f32 %v1180, %v1172
      %v1185 = vmax.f32 %v1181, %v1173
      %v1186 = vmax.f32 %v1182, %v1174
      %v1187 = vmax.f32 %v1183, %v1175
      %v1188 = vmax.f32 %v1184, %v1185
      %v1189 = vmax.f32 %v1186, %v1187
      %v1190 = vmax.f32 %v1188, %v1189
      %v1191 = vrot.slane %v1190, 4
      %v1192 = vmax.f32 %v1190, %v1191
      %v1193 = vrot.slane %v1192, 2
      %v1194 = vmax.f32 %v1192, %v1193
      %v1195 = vrot.slane %v1194, 1
      %v1196 = vmax.f32 %v1194, %v1195
      %vm1197 = vcmp.eq.f32.partialorder %v1160, %v1196
      %vm1198 = vcmp.eq.f32.partialorder %v1161, %v1196
      %vm1199 = vcmp.eq.f32.partialorder %v1162, %v1196
      %vm1200 = vcmp.eq.f32.partialorder %v1163, %v1196
      %vm1201 = vcmp.eq.f32.partialorder %v1164, %v1196
      %vm1202 = vcmp.eq.f32.partialorder %v1165, %v1196
      %vm1203 = vcmp.eq.f32.partialorder %v1166, %v1196
      %vm1204 = vcmp.eq.f32.partialorder %v1167, %v1196
      %vm1205 = vcmp.eq.f32.partialorder %v1168, %v1196
      %vm1206 = vcmp.eq.f32.partialorder %v1169, %v1196
      %vm1207 = vcmp.eq.f32.partialorder %v1170, %v1196
      %vm1208 = vcmp.eq.f32.partialorder %v1171, %v1196
      %vm1209 = vcmp.eq.f32.partialorder %v1172, %v1196
      %vm1210 = vcmp.eq.f32.partialorder %v1173, %v1196
      %vm1211 = vcmp.eq.f32.partialorder %v1174, %v1196
      %vm1212 = vcmp.eq.f32.partialorder %v1175, %v1196
      %v1213 = vsel %vm1197, %v616, 128.0
      %v1214 = vsel %vm1198, %v617, 128.0
      %v1215 = vsel %vm1199, %v618, 128.0
      %v1216 = vsel %vm1200, %v619, 128.0
      %v1217 = vsel %vm1201, %v620, 128.0
      %v1218 = vsel %vm1202, %v621, 128.0
      %v1219 = vsel %vm1203, %v622, 128.0
      %v1220 = vsel %vm1204, %v623, 128.0
      %v1221 = vsel %vm1205, %v624, 128.0
      %v1222 = vsel %vm1206, %v625, 128.0
      %v1223 = vsel %vm1207, %v626, 128.0
      %v1224 = vsel %vm1208, %v627, 128.0
      %v1225 = vsel %vm1209, %v628, 128.0
      %v1226 = vsel %vm1210, %v629, 128.0
      %v1227 = vsel %vm1211, %v630, 128.0
      %v1228 = vsel %vm1212, %v631, 128.0
      %v1229 = vmin.f32 %v1213, %v1217
      %v1230 = vmin.f32 %v1214, %v1218
      %v1231 = vmin.f32 %v1215, %v1219
      %v1232 = vmin.f32 %v1216, %v1220
      %v1233 = vmin.f32 %v1229, %v1221
      %v1234 = vmin.f32 %v1230, %v1222
      %v1235 = vmin.f32 %v1231, %v1223
      %v1236 = vmin.f32 %v1232, %v1224
      %v1237 = vmin.f32 %v1233, %v1225
      %v1238 = vmin.f32 %v1234, %v1226
      %v1239 = vmin.f32 %v1235, %v1227
      %v1240 = vmin.f32 %v1236, %v1228
      %v1241 = vmin.f32 %v1237, %v1238
      %v1242 = vmin.f32 %v1239, %v1240
      %v1243 = vmin.f32 %v1241, %v1242
      %v1244 = vrot.slane %v1243, 4
      %v1245 = vmin.f32 %v1243, %v1244
      %v1246 = vrot.slane %v1245, 2
      %v1247 = vmin.f32 %v1245, %v1246
      %v1248 = vrot.slane %v1247, 1
      %v1249 = vmin.f32 %v1247, %v1248
      %v1250 = vcvt.f32.s32.to.zero.pseudo %v1249
      %s1251 = scalar_lea.vmem %s236, 5
      %1252 = vst [vmem:[%s1251] sm:$0x1] %v1250
      %p1253 = scmp.lt.s32.totalorder %s18, 1
      %s1254 = scalar_select %p1253, %s18, 1
      %p1255 = scmp.lt.s32.totalorder %s19, 0
      %s1256 = scalar_select %p1255, %s19, 0
      %s1257 = smul.addr %s1254, 6
      %s1258 = sadd.s32 %s1256, %s1257
      %s1259 = scalar_lea.vmem %s3, %s1258
      // Predicated region
      $region33: #{elgraph_block_forward.2} parent=31 // pred_check
        %p1260 = pneg %p126
      $region34: #{elgraph_block_forward.2} parent=31 // pred_check_branch
        %1262 = sbr.rel (%p1260) target = $region36
      $region35: #{elgraph_block_forward.2} parent=31 // pred_region
        _
      $region36: #{elgraph_block_forward.2} parent=31 // pred_fallthru
        _
    $region32: #{elgraph_block_forward.2} parent=5 // pred_fallthru
      _
    %p1263 = scmp.le.s32.totalorder 2, %s9
    // Predicated region
    $region37: #{elgraph_block_forward.2} parent=5 // pred_check
      %p1264 = pneg %p1263
    $region38: #{elgraph_block_forward.2} parent=5 // pred_check_branch
      %1266 = sbr.rel (%p1264) target = $region40
    $region39: #{elgraph_block_forward.2} parent=5 // pred_region
      %s1267 = ssub.s32 %s9, 2
      // Predicated region
      $region41: #{elgraph_block_forward.2} parent=39 // pred_check
        %p1268 = pneg %p132
      $region42: #{elgraph_block_forward.2} parent=39 // pred_check_branch
        %1270 = sbr.rel (%p1268) target = $region44
      $region43: #{elgraph_block_forward.2} parent=39 // pred_region
        %p1271 = scmp.lt.s32.totalorder %s20, 1
        %s1272 = scalar_select %p1271, %s20, 1
        %p1273 = scmp.lt.s32.totalorder %s21, 0
        %s1274 = scalar_select %p1273, %s21, 0
        %s1275 = smul.addr %s1272, 6
        %s1276 = sadd.s32 %s1274, %s1275
        %s1277 = scalar_lea.vmem %s3, %s1276
      $region44: #{elgraph_block_forward.2} parent=39 // pred_fallthru
        _
    $region40: #{elgraph_block_forward.2} parent=5 // pred_fallthru
      _
  $region6: #{elgraph_block_forward.2} parent=0 // loop_footer
    %s13 = sadd.s32 1, %s9
  $region7: #{elgraph_block_forward.2} parent=0 // loop_footer_branch
    %8 = sbr.rel target = $region3
  $region8: #{elgraph_block_forward.2} parent=0 // loop_exit
    _

</llo_original>
